<compile_context>
chip_gen: v7x
topology: tpu7x:2x2x1
jax: 0.10.0
libtpu: 0.0.40
codegen_flags: <defaults>
</compile_context>

<pallas_src>
import functools

import jax
import jax.numpy as jnp
from jax.experimental import pallas as pl
from jax.experimental.pallas import tpu as pltpu


DROP_RATE = 0.3
LRELU_SLOPE = 0.2
KEEP_SCALE = 1.0 / (1.0 - DROP_RATE)
# keep an element iff its uint32 random bits >= this threshold  (P = 0.7)
DROP_THRESHOLD = int(DROP_RATE * (1 << 32))


def _round_up(n, m):
    return (n + m - 1) // m * m


# ---------------------------------------------------------------------------
# Kernel
# ---------------------------------------------------------------------------
def _lrelu_dropout(h, bits):
    """Fused leaky_relu(0.2) + training-mode dropout(0.3) (keep-prob scaling)."""
    scaled = h * KEEP_SCALE                                   # fold 1/(1-p) in once
    act = jnp.where(h > 0, scaled, LRELU_SLOPE * scaled)      # leaky relu
    keep = bits >= jnp.uint32(DROP_THRESHOLD)                 # single unsigned cmp
    return jnp.where(keep, act, 0.0)


def discriminator_kernel(x_ref,                                # (tb, D)   bf16
                         m1_ref, m2_ref, m3_ref,               # dropout bits, uint32
                         w1_ref, b1_ref,
                         w2_ref, b2_ref,
                         w3_ref, b3_ref,
                         w4_ref, b4_ref,                       # w4 as (1, 256) row
                         o_ref):
    # fc1 -> leaky_relu(0.2) -> dropout(0.3)
    h = jnp.dot(x_ref[...], w1_ref[...],
                preferred_element_type=jnp.float32) + b1_ref[...]
    h = _lrelu_dropout(h, m1_ref[...])

    # fc2 -> leaky_relu(0.2) -> dropout(0.3)
    h = jnp.dot(h.astype(jnp.bfloat16), w2_ref[...],
                preferred_element_type=jnp.float32) + b2_ref[...]
    h = _lrelu_dropout(h, m2_ref[...])

    # fc3 -> leaky_relu(0.2) -> dropout(0.3)
    h = jnp.dot(h.astype(jnp.bfloat16), w3_ref[...],
                preferred_element_type=jnp.float32) + b3_ref[...]
    h = _lrelu_dropout(h, m3_ref[...])

    # fc4 (N=1 output) -> VPU multiply + row reduction instead of a 1-column
    # MXU matmul; then sigmoid.
    logits = jnp.sum(h * w4_ref[...], axis=-1, keepdims=True) + b4_ref[...]
    o_ref[...] = jax.nn.sigmoid(logits).astype(o_ref.dtype)


# ---------------------------------------------------------------------------
# Wrapper
# ---------------------------------------------------------------------------
@functools.partial(jax.jit, static_argnames=("block_b",))
def discriminator_forward(dropout_key, x, params, *, block_b=256):
    """Fused 4-layer GAN-discriminator forward (training-mode dropout).

    dropout_key : jax PRNG key used for the three dropout masks
    x           : (B, d_input_dim) float32
    params      : dict with w1..w4 stored as (in, out) and b1..b4 as (1, out)
    returns     : (B, 1) float32 in (0, 1)
    """
    B, D = x.shape

    # Batch tile: 256 rows by default (fills MXU sublanes); pad small/ragged B.
    block = block_b if B >= block_b else _round_up(B, 8)
    Bp = _round_up(B, block)
    grid = (Bp // block,)

    # bf16 MXU operands, f32 accumulation / elementwise.
    xp = x.astype(jnp.bfloat16)
    if Bp != B:
        xp = jnp.pad(xp, ((0, Bp - B), (0, 0)))

    w1 = params["w1"].astype(jnp.bfloat16)
    w2 = params["w2"].astype(jnp.bfloat16)
    w3 = params["w3"].astype(jnp.bfloat16)
    w4r = params["w4"].T.astype(jnp.float32)            # (1, 256) row for VPU reduce
    b1, b2, b3, b4 = (params["b1"], params["b2"], params["b3"], params["b4"])

    # Dropout random bits generated host-side (per padded batch), streamed per tile.
    k1, k2, k3 = jax.random.split(dropout_key, 3)
    bits1 = jax.random.bits(k1, (Bp, 1024), dtype=jnp.uint32)
    bits2 = jax.random.bits(k2, (Bp, 512), dtype=jnp.uint32)
    bits3 = jax.random.bits(k3, (Bp, 256), dtype=jnp.uint32)

    batch_spec = lambda a: pl.BlockSpec((block, a.shape[1]), lambda i: (i, 0))
    full2d = lambda a: pl.BlockSpec(a.shape, lambda i: (0, 0))

    flops = 2 * Bp * (D * 1024 + 1024 * 512 + 512 * 256 + 256)
    bytes_accessed = (
        xp.size * xp.dtype.itemsize
        + sum(a.size * a.dtype.itemsize for a in (bits1, bits2, bits3))
        + sum(a.size * a.dtype.itemsize
              for a in (w1, b1, w2, b2, w3, b3, w4r, b4))
        + Bp * 4
    )

    out = pl.pallas_call(
        discriminator_kernel,
        out_shape=jax.ShapeDtypeStruct((Bp, 1), jnp.float32),
        grid=grid,
        in_specs=[
            batch_spec(xp),
            batch_spec(bits1), batch_spec(bits2), batch_spec(bits3),
            full2d(w1), full2d(b1),
            full2d(w2), full2d(b2),
            full2d(w3), full2d(b3),
            full2d(w4r), full2d(b4),
        ],
        out_specs=pl.BlockSpec((block, 1), lambda i: (i, 0)),
        compiler_params=pltpu.CompilerParams(
            # Batch tiles are independent (masks come from per-row bits), so the
            # grid can shard across both TensorCores on v7x.
            dimension_semantics=("parallel",),
        ),
        cost_estimate=pl.CostEstimate(
            flops=flops, transcendentals=Bp, bytes_accessed=bytes_accessed),
    )(xp, bits1, bits2, bits3, w1, b1, w2, b2, w3, b3, w4r, b4)

    return out[:B]


# ---------------------------------------------------------------------------
# Deterministic parameter init (shapes from Discriminator.__init__)
# ---------------------------------------------------------------------------
def init_params(key, d_input_dim):
    dims = [(d_input_dim, 1024), (1024, 512), (512, 256), (256, 1)]
    params = {}
    for idx, (fan_in, fan_out) in enumerate(dims, start=1):
        key, kw, kb = jax.random.split(key, 3)
        bound = 1.0 / jnp.sqrt(fan_in)  # torch.nn.Linear default init range
        # stored as (in, out); torch stores (out, in) -> this is its transpose
        params[f"w{idx}"] = jax.random.uniform(
            kw, (fan_in, fan_out), jnp.float32, -bound, bound)
        params[f"b{idx}"] = jax.random.uniform(
            kb, (1, fan_out), jnp.float32, -bound, bound)
    return params


# ---------------------------------------------------------------------------
# Main
# ---------------------------------------------------------------------------
if __name__ == "__main__":
    D_INPUT_DIM = 128   # small synthetic input dim (e.g. 784 for MNIST in practice)
    BATCH = 8

    root = jax.random.PRNGKey(0)
    kparams, kx, kdrop = jax.random.split(root, 3)

    x = jax.random.normal(kx, (BATCH, D_INPUT_DIM), jnp.float32)
    params = init_params(kparams, D_INPUT_DIM)

    out = discriminator_forward(kdrop, x, params)
    out = jax.block_until_ready(out)

    assert out.shape == (BATCH, 1), out.shape
    assert bool(jnp.all(jnp.isfinite(out)))
    assert bool(jnp.all((out >= 0.0) & (out <= 1.0)))

    print("KERNEL_OK")
</pallas_src>

<mosaic_0001>
module attributes {stable_mosaic.version = 11 : i64} {
  func.func @discriminator_kernel(%arg0: i32, %arg1: memref<8x128xbf16, #tpu.memory_space<vmem>>, %arg2: memref<8x1024xi32, #tpu.memory_space<vmem>>, %arg3: memref<8x512xi32, #tpu.memory_space<vmem>>, %arg4: memref<8x256xi32, #tpu.memory_space<vmem>>, %arg5: memref<128x1024xbf16, #tpu.memory_space<vmem>>, %arg6: memref<1x1024xf32, #tpu.memory_space<vmem>>, %arg7: memref<1024x512xbf16, #tpu.memory_space<vmem>>, %arg8: memref<1x512xf32, #tpu.memory_space<vmem>>, %arg9: memref<512x256xbf16, #tpu.memory_space<vmem>>, %arg10: memref<1x256xf32, #tpu.memory_space<vmem>>, %arg11: memref<1x256xf32, #tpu.memory_space<vmem>>, %arg12: memref<1x1xf32, #tpu.memory_space<vmem>>, %arg13: memref<8x1xf32, #tpu.memory_space<vmem>>) attributes {dimension_semantics = [#tpu.dimension_semantics<parallel>], iteration_bounds = array<i64: 1>, scalar_prefetch = 0 : i64, scratch_operands = 0 : i64, tpu.core_type = #tpu.core_type<tc>, window_params = [{transform_indices = @transform_0, window_bounds = array<i64: 8, 128>}, {transform_indices = @transform_1, window_bounds = array<i64: 8, 1024>}, {transform_indices = @transform_2, window_bounds = array<i64: 8, 512>}, {transform_indices = @transform_3, window_bounds = array<i64: 8, 256>}, {pipeline_mode = #tpu.pipeline_mode<synchronous>, transform_indices = @transform_4, window_bounds = array<i64: 128, 1024>}, {pipeline_mode = #tpu.pipeline_mode<synchronous>, transform_indices = @transform_5, window_bounds = array<i64: 1, 1024>}, {pipeline_mode = #tpu.pipeline_mode<synchronous>, transform_indices = @transform_6, window_bounds = array<i64: 1024, 512>}, {pipeline_mode = #tpu.pipeline_mode<synchronous>, transform_indices = @transform_7, window_bounds = array<i64: 1, 512>}, {pipeline_mode = #tpu.pipeline_mode<synchronous>, transform_indices = @transform_8, window_bounds = array<i64: 512, 256>}, {pipeline_mode = #tpu.pipeline_mode<synchronous>, transform_indices = @transform_9, window_bounds = array<i64: 1, 256>}, {pipeline_mode = #tpu.pipeline_mode<synchronous>, transform_indices = @transform_10, window_bounds = array<i64: 1, 256>}, {pipeline_mode = #tpu.pipeline_mode<synchronous>, transform_indices = @transform_11, window_bounds = array<i64: 1, 1>}, {transform_indices = @transform_12, window_bounds = array<i64: 8, 1>}]} {
    %c0 = arith.constant 0 : index
    %c0_0 = arith.constant 0 : index
    %0 = vector.load %arg1[%c0, %c0_0] : memref<8x128xbf16, #tpu.memory_space<vmem>>, vector<8x128xbf16>
    %c0_1 = arith.constant 0 : index
    %c0_2 = arith.constant 0 : index
    %1 = vector.load %arg5[%c0_1, %c0_2] : memref<128x1024xbf16, #tpu.memory_space<vmem>>, vector<128x1024xbf16>
    %cst = arith.constant dense<0.000000e+00> : vector<8x1024xf32>
    %2 = tpu.matmul %0, %1, %cst {dimension_numbers = #tpu.dot_dimension_numbers<[1], [0], [0], [1], [0, 0, 1, 1], [], []>} : vector<8x128xbf16>, vector<128x1024xbf16>, vector<8x1024xf32> -> vector<8x1024xf32>
    %c0_3 = arith.constant 0 : index
    %c0_4 = arith.constant 0 : index
    %3 = vector.load %arg6[%c0_3, %c0_4] : memref<1x1024xf32, #tpu.memory_space<vmem>>, vector<1x1024xf32>
    %4 = vector.broadcast %3 : vector<1x1024xf32> to vector<8x1024xf32>
    %5 = arith.addf %2, %4 : vector<8x1024xf32>
    %c0_5 = arith.constant 0 : index
    %c0_6 = arith.constant 0 : index
    %6 = vector.load %arg2[%c0_5, %c0_6] : memref<8x1024xi32, #tpu.memory_space<vmem>>, vector<8x1024xi32>
    %cst_7 = arith.constant 1.42857146 : f32
    %7 = vector.broadcast %cst_7 : f32 to vector<8x1024xf32>
    %8 = arith.mulf %5, %7 : vector<8x1024xf32>
    %cst_8 = arith.constant 0.000000e+00 : f32
    %9 = vector.broadcast %cst_8 : f32 to vector<8x1024xf32>
    %10 = arith.cmpf ogt, %5, %9 : vector<8x1024xf32>
    %cst_9 = arith.constant 2.000000e-01 : f32
    %11 = vector.broadcast %cst_9 : f32 to vector<8x1024xf32>
    %12 = arith.mulf %11, %8 : vector<8x1024xf32>
    %13 = arith.select %10, %8, %12 : vector<8x1024xi1>, vector<8x1024xf32>
    %c1288490188_i32 = arith.constant 1288490188 : i32
    %14 = vector.broadcast %c1288490188_i32 : i32 to vector<8x1024xi32>
    %15 = arith.cmpi uge, %6, %14 : vector<8x1024xi32>
    %cst_10 = arith.constant 0.000000e+00 : f32
    %16 = vector.broadcast %cst_10 : f32 to vector<8x1024xf32>
    %17 = arith.select %15, %13, %16 : vector<8x1024xi1>, vector<8x1024xf32>
    %18 = arith.truncf %17 : vector<8x1024xf32> to vector<8x1024xbf16>
    %c0_11 = arith.constant 0 : index
    %c0_12 = arith.constant 0 : index
    %19 = vector.load %arg7[%c0_11, %c0_12] : memref<1024x512xbf16, #tpu.memory_space<vmem>>, vector<1024x512xbf16>
    %cst_13 = arith.constant dense<0.000000e+00> : vector<8x512xf32>
    %20 = tpu.matmul %18, %19, %cst_13 {dimension_numbers = #tpu.dot_dimension_numbers<[1], [0], [0], [1], [0, 0, 1, 1], [], []>} : vector<8x1024xbf16>, vector<1024x512xbf16>, vector<8x512xf32> -> vector<8x512xf32>
    %c0_14 = arith.constant 0 : index
    %c0_15 = arith.constant 0 : index
    %21 = vector.load %arg8[%c0_14, %c0_15] : memref<1x512xf32, #tpu.memory_space<vmem>>, vector<1x512xf32>
    %22 = vector.broadcast %21 : vector<1x512xf32> to vector<8x512xf32>
    %23 = arith.addf %20, %22 : vector<8x512xf32>
    %c0_16 = arith.constant 0 : index
    %c0_17 = arith.constant 0 : index
    %24 = vector.load %arg3[%c0_16, %c0_17] : memref<8x512xi32, #tpu.memory_space<vmem>>, vector<8x512xi32>
    %cst_18 = arith.constant 1.42857146 : f32
    %25 = vector.broadcast %cst_18 : f32 to vector<8x512xf32>
    %26 = arith.mulf %23, %25 : vector<8x512xf32>
    %cst_19 = arith.constant 0.000000e+00 : f32
    %27 = vector.broadcast %cst_19 : f32 to vector<8x512xf32>
    %28 = arith.cmpf ogt, %23, %27 : vector<8x512xf32>
    %cst_20 = arith.constant 2.000000e-01 : f32
    %29 = vector.broadcast %cst_20 : f32 to vector<8x512xf32>
    %30 = arith.mulf %29, %26 : vector<8x512xf32>
    %31 = arith.select %28, %26, %30 : vector<8x512xi1>, vector<8x512xf32>
    %c1288490188_i32_21 = arith.constant 1288490188 : i32
    %32 = vector.broadcast %c1288490188_i32_21 : i32 to vector<8x512xi32>
    %33 = arith.cmpi uge, %24, %32 : vector<8x512xi32>
    %cst_22 = arith.constant 0.000000e+00 : f32
    %34 = vector.broadcast %cst_22 : f32 to vector<8x512xf32>
    %35 = arith.select %33, %31, %34 : vector<8x512xi1>, vector<8x512xf32>
    %36 = arith.truncf %35 : vector<8x512xf32> to vector<8x512xbf16>
    %c0_23 = arith.constant 0 : index
    %c0_24 = arith.constant 0 : index
    %37 = vector.load %arg9[%c0_23, %c0_24] : memref<512x256xbf16, #tpu.memory_space<vmem>>, vector<512x256xbf16>
    %cst_25 = arith.constant dense<0.000000e+00> : vector<8x256xf32>
    %38 = tpu.matmul %36, %37, %cst_25 {dimension_numbers = #tpu.dot_dimension_numbers<[1], [0], [0], [1], [0, 0, 1, 1], [], []>} : vector<8x512xbf16>, vector<512x256xbf16>, vector<8x256xf32> -> vector<8x256xf32>
    %c0_26 = arith.constant 0 : index
    %c0_27 = arith.constant 0 : index
    %39 = vector.load %arg10[%c0_26, %c0_27] : memref<1x256xf32, #tpu.memory_space<vmem>>, vector<1x256xf32>
    %40 = vector.broadcast %39 : vector<1x256xf32> to vector<8x256xf32>
    %41 = arith.addf %38, %40 : vector<8x256xf32>
    %c0_28 = arith.constant 0 : index
    %c0_29 = arith.constant 0 : index
    %42 = vector.load %arg4[%c0_28, %c0_29] : memref<8x256xi32, #tpu.memory_space<vmem>>, vector<8x256xi32>
    %cst_30 = arith.constant 1.42857146 : f32
    %43 = vector.broadcast %cst_30 : f32 to vector<8x256xf32>
    %44 = arith.mulf %41, %43 : vector<8x256xf32>
    %cst_31 = arith.constant 0.000000e+00 : f32
    %45 = vector.broadcast %cst_31 : f32 to vector<8x256xf32>
    %46 = arith.cmpf ogt, %41, %45 : vector<8x256xf32>
    %cst_32 = arith.constant 2.000000e-01 : f32
    %47 = vector.broadcast %cst_32 : f32 to vector<8x256xf32>
    %48 = arith.mulf %47, %44 : vector<8x256xf32>
    %49 = arith.select %46, %44, %48 : vector<8x256xi1>, vector<8x256xf32>
    %c1288490188_i32_33 = arith.constant 1288490188 : i32
    %50 = vector.broadcast %c1288490188_i32_33 : i32 to vector<8x256xi32>
    %51 = arith.cmpi uge, %42, %50 : vector<8x256xi32>
    %cst_34 = arith.constant 0.000000e+00 : f32
    %52 = vector.broadcast %cst_34 : f32 to vector<8x256xf32>
    %53 = arith.select %51, %49, %52 : vector<8x256xi1>, vector<8x256xf32>
    %c0_35 = arith.constant 0 : index
    %c0_36 = arith.constant 0 : index
    %54 = vector.load %arg11[%c0_35, %c0_36] : memref<1x256xf32, #tpu.memory_space<vmem>>, vector<1x256xf32>
    %55 = vector.broadcast %54 : vector<1x256xf32> to vector<8x256xf32>
    %56 = arith.mulf %53, %55 : vector<8x256xf32>
    %cst_37 = arith.constant dense<0.000000e+00> : vector<8xf32>
    %57 = vector.multi_reduction <add>, %56, %cst_37 [1] : vector<8x256xf32> to vector<8xf32>
    %58 = vector.shape_cast %57 : vector<8xf32> to vector<8x1xf32>
    %c0_38 = arith.constant 0 : index
    %c0_39 = arith.constant 0 : index
    %59 = vector.load %arg12[%c0_38, %c0_39] : memref<1x1xf32, #tpu.memory_space<vmem>>, vector<1x1xf32>
    %60 = vector.broadcast %59 : vector<1x1xf32> to vector<8x1xf32>
    %61 = arith.addf %58, %60 : vector<8x1xf32>
    %62 = arith.negf %61 : vector<8x1xf32>
    %63 = math.exp %62 : vector<8x1xf32>
    %cst_40 = arith.constant 1.000000e+00 : f32
    %64 = vector.broadcast %cst_40 : f32 to vector<8x1xf32>
    %65 = arith.addf %64, %63 : vector<8x1xf32>
    %66 = arith.divf %64, %65 : vector<8x1xf32>
    %c0_41 = arith.constant 0 : index
    %c0_42 = arith.constant 0 : index
    %67 = vector.load %arg13[%c0_41, %c0_42] : memref<8x1xf32, #tpu.memory_space<vmem>>, vector<8x1xf32>
    tpu.vector_store %arg13[%c0_41, %c0_42], %66 {strides = array<i32>} : memref<8x1xf32, #tpu.memory_space<vmem>>, vector<8x1xf32>,
    return
  }
  func.func @transform_0(%arg0: i32) -> (i32, i32) {
    %c0_i32 = arith.constant 0 : i32
    %c0_i32_0 = arith.constant 0 : i32
    return %arg0, %c0_i32 : i32, i32
  }
  func.func @transform_1(%arg0: i32) -> (i32, i32) {
    %c0_i32 = arith.constant 0 : i32
    %c0_i32_0 = arith.constant 0 : i32
    return %arg0, %c0_i32 : i32, i32
  }
  func.func @transform_2(%arg0: i32) -> (i32, i32) {
    %c0_i32 = arith.constant 0 : i32
    %c0_i32_0 = arith.constant 0 : i32
    return %arg0, %c0_i32 : i32, i32
  }
  func.func @transform_3(%arg0: i32) -> (i32, i32) {
    %c0_i32 = arith.constant 0 : i32
    %c0_i32_0 = arith.constant 0 : i32
    return %arg0, %c0_i32 : i32, i32
  }
  func.func @transform_4(%arg0: i32) -> (i32, i32) {
    %c0_i32 = arith.constant 0 : i32
    %c0_i32_0 = arith.constant 0 : i32
    %c0_i32_1 = arith.constant 0 : i32
    return %c0_i32, %c0_i32_0 : i32, i32
  }
  func.func @transform_5(%arg0: i32) -> (i32, i32) {
    %c0_i32 = arith.constant 0 : i32
    %c0_i32_0 = arith.constant 0 : i32
    %c0_i32_1 = arith.constant 0 : i32
    return %c0_i32, %c0_i32_0 : i32, i32
  }
  func.func @transform_6(%arg0: i32) -> (i32, i32) {
    %c0_i32 = arith.constant 0 : i32
    %c0_i32_0 = arith.constant 0 : i32
    %c0_i32_1 = arith.constant 0 : i32
    return %c0_i32, %c0_i32_0 : i32, i32
  }
  func.func @transform_7(%arg0: i32) -> (i32, i32) {
    %c0_i32 = arith.constant 0 : i32
    %c0_i32_0 = arith.constant 0 : i32
    %c0_i32_1 = arith.constant 0 : i32
    return %c0_i32, %c0_i32_0 : i32, i32
  }
  func.func @transform_8(%arg0: i32) -> (i32, i32) {
    %c0_i32 = arith.constant 0 : i32
    %c0_i32_0 = arith.constant 0 : i32
    %c0_i32_1 = arith.constant 0 : i32
    return %c0_i32, %c0_i32_0 : i32, i32
  }
  func.func @transform_9(%arg0: i32) -> (i32, i32) {
    %c0_i32 = arith.constant 0 : i32
    %c0_i32_0 = arith.constant 0 : i32
    %c0_i32_1 = arith.constant 0 : i32
    return %c0_i32, %c0_i32_0 : i32, i32
  }
  func.func @transform_10(%arg0: i32) -> (i32, i32) {
    %c0_i32 = arith.constant 0 : i32
    %c0_i32_0 = arith.constant 0 : i32
    %c0_i32_1 = arith.constant 0 : i32
    return %c0_i32, %c0_i32_0 : i32, i32
  }
  func.func @transform_11(%arg0: i32) -> (i32, i32) {
    %c0_i32 = arith.constant 0 : i32
    %c0_i32_0 = arith.constant 0 : i32
    %c0_i32_1 = arith.constant 0 : i32
    return %c0_i32, %c0_i32_0 : i32, i32
  }
  func.func @transform_12(%arg0: i32) -> (i32, i32) {
    %c0_i32 = arith.constant 0 : i32
    %c0_i32_0 = arith.constant 0 : i32
    return %arg0, %c0_i32 : i32, i32
  }
}

</mosaic_0001>

<llo_original>
// kernel: discriminator_forward.3
$region0: #{discriminator_forward.3}
  #allocation0 [shape = 'u32[]', space=smem, size = 0x4, offset = 0x4, fixed_abs, tag = 'smem constant byte address 0x4 - core index']
  #allocation1 [shape = 'u32[144,128]{1,0:T(1,128)}', space=vmem, size = 0x12000, scoped, tag = 'internal scratch']
  #allocation2 [shape = 'f32[1,1]{1,0:T(1,128)S(1)}', space=vmem, size = 0x200, scoped, tag = 'scoped memory for discriminator_forward.3']
  %s0 = inlined_call_operand.vmem [shape: bf16[8,128], index: 0, kind: input, shape index: {}]
  %s1 = inlined_call_operand.vmem [shape: u32[8,1024], index: 1, kind: input, shape index: {}]
  %s2 = inlined_call_operand.vmem [shape: u32[8,512], index: 2, kind: input, shape index: {}]
  %s3 = inlined_call_operand.vmem [shape: u32[8,256], index: 3, kind: input, shape index: {}]
  %s4 = inlined_call_operand.vmem [shape: bf16[128,1024], index: 4, kind: input, shape index: {}]
  %s5 = inlined_call_operand.vmem [shape: f32[1,1024], index: 5, kind: input, shape index: {}]
  %s6 = inlined_call_operand.vmem [shape: bf16[1024,512], index: 6, kind: input, shape index: {}]
  %s7 = inlined_call_operand.vmem [shape: f32[1,512], index: 7, kind: input, shape index: {}]
  %s8 = inlined_call_operand.vmem [shape: bf16[512,256], index: 8, kind: input, shape index: {}]
  %s9 = inlined_call_operand.vmem [shape: f32[1,256], index: 9, kind: input, shape index: {}]
  %s10 = inlined_call_operand.vmem [shape: f32[1,256], index: 10, kind: input, shape index: {}]
  %s11 = inlined_call_operand.<no memory space> [shape: f32[1,1], index: 11, kind: input, shape index: {}]
  %s12 = inlined_call_operand.vmem [shape: f32[8,1], index: 12, kind: output, shape index: {}]
  %s13 = sld [smem:[#allocation0]]
  $region58: #{discriminator_forward.3} parent=0
    _
  %s15 = ssub.s32 1, %s13
  %s16 = scalar_select 0, %s15, %s13
  %v17 = vstv %s11
  %18 = vst [vmem:[#allocation2] sm:$0x1] %v17
  // Predicated region
  $region2: #{discriminator_forward.3} parent=0 // pred_check
    _
  $region3: #{discriminator_forward.3} parent=0 // pred_check_branch
    %20 = sbr.rel (0) target = $region5
  $region4: #{discriminator_forward.3} parent=0 // pred_region
    _
  $region5: #{discriminator_forward.3} parent=0 // pred_fallthru
    _
  // Predicated region
  $region6: #{discriminator_forward.3} parent=0 // pred_check
    _
  $region7: #{discriminator_forward.3} parent=0 // pred_check_branch
    %22 = sbr.rel (0) target = $region9
  $region8: #{discriminator_forward.3} parent=0 // pred_region
    _
  $region9: #{discriminator_forward.3} parent=0 // pred_fallthru
    _
  // Predicated region
  $region10: #{discriminator_forward.3} parent=0 // pred_check
    _
  $region11: #{discriminator_forward.3} parent=0 // pred_check_branch
    %24 = sbr.rel (0) target = $region13
  $region12: #{discriminator_forward.3} parent=0 // pred_region
    _
  $region13: #{discriminator_forward.3} parent=0 // pred_fallthru
    _
  // Predicated region
  $region14: #{discriminator_forward.3} parent=0 // pred_check
    _
  $region15: #{discriminator_forward.3} parent=0 // pred_check_branch
    %26 = sbr.rel (0) target = $region17
  $region16: #{discriminator_forward.3} parent=0 // pred_region
    _
  $region17: #{discriminator_forward.3} parent=0 // pred_fallthru
    _
  // Predicated region
  $region18: #{discriminator_forward.3} parent=0 // pred_check
    _
  $region19: #{discriminator_forward.3} parent=0 // pred_check_branch
    %28 = sbr.rel (0) target = $region21
  $region20: #{discriminator_forward.3} parent=0 // pred_region
    _
  $region21: #{discriminator_forward.3} parent=0 // pred_fallthru
    _
  // Predicated region
  $region22: #{discriminator_forward.3} parent=0 // pred_check
    _
  $region23: #{discriminator_forward.3} parent=0 // pred_check_branch
    %30 = sbr.rel (0) target = $region25
  $region24: #{discriminator_forward.3} parent=0 // pred_region
    _
  $region25: #{discriminator_forward.3} parent=0 // pred_fallthru
    _
  // Predicated region
  $region26: #{discriminator_forward.3} parent=0 // pred_check
    _
  $region27: #{discriminator_forward.3} parent=0 // pred_check_branch
    %32 = sbr.rel (0) target = $region29
  $region28: #{discriminator_forward.3} parent=0 // pred_region
    _
  $region29: #{discriminator_forward.3} parent=0 // pred_fallthru
    _
  // Predicated region
  $region30: #{discriminator_forward.3} parent=0 // pred_check
    _
  $region31: #{discriminator_forward.3} parent=0 // pred_check_branch
    %34 = sbr.rel (0) target = $region33
  $region32: #{discriminator_forward.3} parent=0 // pred_region
    _
  $region33: #{discriminator_forward.3} parent=0 // pred_fallthru
    _
  // Predicated region
  $region34: #{discriminator_forward.3} parent=0 // pred_check
    _
  $region35: #{discriminator_forward.3} parent=0 // pred_check_branch
    %36 = sbr.rel (0) target = $region37
  $region36: #{discriminator_forward.3} parent=0 // pred_region
    _
  $region37: #{discriminator_forward.3} parent=0 // pred_fallthru
    _
  // Predicated region
  $region38: #{discriminator_forward.3} parent=0 // pred_check
    _
  $region39: #{discriminator_forward.3} parent=0 // pred_check_branch
    %38 = sbr.rel (0) target = $region41
  $region40: #{discriminator_forward.3} parent=0 // pred_region
    _
  $region41: #{discriminator_forward.3} parent=0 // pred_fallthru
    _
  // Predicated region
  $region42: #{discriminator_forward.3} parent=0 // pred_check
    _
  $region43: #{discriminator_forward.3} parent=0 // pred_check_branch
    %40 = sbr.rel (0) target = $region45
  $region44: #{discriminator_forward.3} parent=0 // pred_region
    _
  $region45: #{discriminator_forward.3} parent=0 // pred_fallthru
    _
  // Predicated region
  $region46: #{discriminator_forward.3} parent=0 // pred_check
    _
  $region47: #{discriminator_forward.3} parent=0 // pred_check_branch
    %42 = sbr.rel (0) target = $region49
  $region48: #{discriminator_forward.3} parent=0 // pred_region
    _
  $region49: #{discriminator_forward.3} parent=0 // pred_fallthru
    _
  %v44 = vld [vmem:[%s0] sm:$0xf]
  %v45 = vld [vmem:[%s4] sm:$0xff]
  %v46 = vld [vmem:[%s4 + $0x8] sm:$0xff]
  %v47 = vld [vmem:[%s4 + $0x10] sm:$0xff]
  %v48 = vld [vmem:[%s4 + $0x18] sm:$0xff]
  %v49 = vld [vmem:[%s4 + $0x20] sm:$0xff]
  %v50 = vld [vmem:[%s4 + $0x28] sm:$0xff]
  %v51 = vld [vmem:[%s4 + $0x30] sm:$0xff]
  %v52 = vld [vmem:[%s4 + $0x38] sm:$0xff]
  %v53 = vld [vmem:[%s4 + $0x40] sm:$0xff]
  %v54 = vld [vmem:[%s4 + $0x48] sm:$0xff]
  %v55 = vld [vmem:[%s4 + $0x50] sm:$0xff]
  %v56 = vld [vmem:[%s4 + $0x58] sm:$0xff]
  %v57 = vld [vmem:[%s4 + $0x60] sm:$0xff]
  %v58 = vld [vmem:[%s4 + $0x68] sm:$0xff]
  %v59 = vld [vmem:[%s4 + $0x70] sm:$0xff]
  %v60 = vld [vmem:[%s4 + $0x78] sm:$0xff]
  %v61 = vld [vmem:[%s4 + $0x80] sm:$0xff]
  %v62 = vld [vmem:[%s4 + $0x88] sm:$0xff]
  %v63 = vld [vmem:[%s4 + $0x90] sm:$0xff]
  %v64 = vld [vmem:[%s4 + $0x98] sm:$0xff]
  %v65 = vld [vmem:[%s4 + $0xa0] sm:$0xff]
  %v66 = vld [vmem:[%s4 + $0xa8] sm:$0xff]
  %v67 = vld [vmem:[%s4 + $0xb0] sm:$0xff]
  %v68 = vld [vmem:[%s4 + $0xb8] sm:$0xff]
  %v69 = vld [vmem:[%s4 + $0xc0] sm:$0xff]
  %v70 = vld [vmem:[%s4 + $0xc8] sm:$0xff]
  %v71 = vld [vmem:[%s4 + $0xd0] sm:$0xff]
  %v72 = vld [vmem:[%s4 + $0xd8] sm:$0xff]
  %v73 = vld [vmem:[%s4 + $0xe0] sm:$0xff]
  %v74 = vld [vmem:[%s4 + $0xe8] sm:$0xff]
  %v75 = vld [vmem:[%s4 + $0xf0] sm:$0xff]
  %v76 = vld [vmem:[%s4 + $0xf8] sm:$0xff]
  %v77 = vld [vmem:[%s4 + $0x100] sm:$0xff]
  %v78 = vld [vmem:[%s4 + $0x108] sm:$0xff]
  %v79 = vld [vmem:[%s4 + $0x110] sm:$0xff]
  %v80 = vld [vmem:[%s4 + $0x118] sm:$0xff]
  %v81 = vld [vmem:[%s4 + $0x120] sm:$0xff]
  %v82 = vld [vmem:[%s4 + $0x128] sm:$0xff]
  %v83 = vld [vmem:[%s4 + $0x130] sm:$0xff]
  %v84 = vld [vmem:[%s4 + $0x138] sm:$0xff]
  %v85 = vld [vmem:[%s4 + $0x140] sm:$0xff]
  %v86 = vld [vmem:[%s4 + $0x148] sm:$0xff]
  %v87 = vld [vmem:[%s4 + $0x150] sm:$0xff]
  %v88 = vld [vmem:[%s4 + $0x158] sm:$0xff]
  %v89 = vld [vmem:[%s4 + $0x160] sm:$0xff]
  %v90 = vld [vmem:[%s4 + $0x168] sm:$0xff]
  %v91 = vld [vmem:[%s4 + $0x170] sm:$0xff]
  %v92 = vld [vmem:[%s4 + $0x178] sm:$0xff]
  %v93 = vld [vmem:[%s4 + $0x180] sm:$0xff]
  %v94 = vld [vmem:[%s4 + $0x188] sm:$0xff]
  %v95 = vld [vmem:[%s4 + $0x190] sm:$0xff]
  %v96 = vld [vmem:[%s4 + $0x198] sm:$0xff]
  %v97 = vld [vmem:[%s4 + $0x1a0] sm:$0xff]
  %v98 = vld [vmem:[%s4 + $0x1a8] sm:$0xff]
  %v99 = vld [vmem:[%s4 + $0x1b0] sm:$0xff]
  %v100 = vld [vmem:[%s4 + $0x1b8] sm:$0xff]
  %v101 = vld [vmem:[%s4 + $0x1c0] sm:$0xff]
  %v102 = vld [vmem:[%s4 + $0x1c8] sm:$0xff]
  %v103 = vld [vmem:[%s4 + $0x1d0] sm:$0xff]
  %v104 = vld [vmem:[%s4 + $0x1d8] sm:$0xff]
  %v105 = vld [vmem:[%s4 + $0x1e0] sm:$0xff]
  %v106 = vld [vmem:[%s4 + $0x1e8] sm:$0xff]
  %v107 = vld [vmem:[%s4 + $0x1f0] sm:$0xff]
  %v108 = vld [vmem:[%s4 + $0x1f8] sm:$0xff]
  %v109 = vld [vmem:[%s5] sm:$0xff]
  %v111 = vlaneseq
  %v112 = vshrl.u32 %v111, 7
  %v113 = vsub.s32 0, %v112
  %v114 = vrot.slane %v109, %v113
  %v115 = vlaneseq
  %v116 = vshrl.u32 %v115, 7
  %v117 = vsub.s32 1, %v116
  %v118 = vrot.slane %v109, %v117
  %v119 = vlaneseq
  %v120 = vshrl.u32 %v119, 7
  %v121 = vsub.s32 2, %v120
  %v122 = vrot.slane %v109, %v121
  %v123 = vlaneseq
  %v124 = vshrl.u32 %v123, 7
  %v125 = vsub.s32 3, %v124
  %v126 = vrot.slane %v109, %v125
  %v127 = vlaneseq
  %v128 = vshrl.u32 %v127, 7
  %v129 = vsub.s32 4, %v128
  %v130 = vrot.slane %v109, %v129
  %v131 = vlaneseq
  %v132 = vshrl.u32 %v131, 7
  %v133 = vsub.s32 5, %v132
  %v134 = vrot.slane %v109, %v133
  %v135 = vlaneseq
  %v136 = vshrl.u32 %v135, 7
  %v137 = vsub.s32 6, %v136
  %v138 = vrot.slane %v109, %v137
  %v139 = vlaneseq
  %v140 = vshrl.u32 %v139, 7
  %v141 = vsub.s32 7, %v140
  %v142 = vrot.slane %v109, %v141
  %v215 = vunpack.c.l.b16 %v45
  %v216 = vunpack.c.h.b16 %v45
  %v217 = vunpack.c.l.b16 %v46
  %v218 = vunpack.c.h.b16 %v46
  %v219 = vunpack.c.l.b16 %v47
  %v220 = vunpack.c.h.b16 %v47
  %v221 = vunpack.c.l.b16 %v48
  %v222 = vunpack.c.h.b16 %v48
  %v223 = vunpack.c.l.b16 %v49
  %v224 = vunpack.c.h.b16 %v49
  %v225 = vunpack.c.l.b16 %v50
  %v226 = vunpack.c.h.b16 %v50
  %v227 = vunpack.c.l.b16 %v51
  %v228 = vunpack.c.h.b16 %v51
  %v229 = vunpack.c.l.b16 %v52
  %v230 = vunpack.c.h.b16 %v52
  %v231 = vunpack.c.l.b16 %v53
  %v232 = vunpack.c.h.b16 %v53
  %v233 = vunpack.c.l.b16 %v54
  %v234 = vunpack.c.h.b16 %v54
  %v235 = vunpack.c.l.b16 %v55
  %v236 = vunpack.c.h.b16 %v55
  %v237 = vunpack.c.l.b16 %v56
  %v238 = vunpack.c.h.b16 %v56
  %v239 = vunpack.c.l.b16 %v57
  %v240 = vunpack.c.h.b16 %v57
  %v241 = vunpack.c.l.b16 %v58
  %v242 = vunpack.c.h.b16 %v58
  %v243 = vunpack.c.l.b16 %v59
  %v244 = vunpack.c.h.b16 %v59
  %v245 = vunpack.c.l.b16 %v60
  %v246 = vunpack.c.h.b16 %v60
  %v247 = vunpack.c.l.b16 %v61
  %v248 = vunpack.c.h.b16 %v61
  %v249 = vunpack.c.l.b16 %v62
  %v250 = vunpack.c.h.b16 %v62
  %v251 = vunpack.c.l.b16 %v63
  %v252 = vunpack.c.h.b16 %v63
  %v253 = vunpack.c.l.b16 %v64
  %v254 = vunpack.c.h.b16 %v64
  %v255 = vunpack.c.l.b16 %v65
  %v256 = vunpack.c.h.b16 %v65
  %v257 = vunpack.c.l.b16 %v66
  %v258 = vunpack.c.h.b16 %v66
  %v259 = vunpack.c.l.b16 %v67
  %v260 = vunpack.c.h.b16 %v67
  %v261 = vunpack.c.l.b16 %v68
  %v262 = vunpack.c.h.b16 %v68
  %v263 = vunpack.c.l.b16 %v69
  %v264 = vunpack.c.h.b16 %v69
  %v265 = vunpack.c.l.b16 %v70
  %v266 = vunpack.c.h.b16 %v70
  %v267 = vunpack.c.l.b16 %v71
  %v268 = vunpack.c.h.b16 %v71
  %v269 = vunpack.c.l.b16 %v72
  %v270 = vunpack.c.h.b16 %v72
  %v271 = vunpack.c.l.b16 %v73
  %v272 = vunpack.c.h.b16 %v73
  %v273 = vunpack.c.l.b16 %v74
  %v274 = vunpack.c.h.b16 %v74
  %v275 = vunpack.c.l.b16 %v75
  %v276 = vunpack.c.h.b16 %v75
  %v277 = vunpack.c.l.b16 %v76
  %v278 = vunpack.c.h.b16 %v76
  %v279 = vunpack.c.l.b16 %v77
  %v280 = vunpack.c.h.b16 %v77
  %v281 = vunpack.c.l.b16 %v78
  %v282 = vunpack.c.h.b16 %v78
  %v283 = vunpack.c.l.b16 %v79
  %v284 = vunpack.c.h.b16 %v79
  %v285 = vunpack.c.l.b16 %v80
  %v286 = vunpack.c.h.b16 %v80
  %v287 = vunpack.c.l.b16 %v81
  %v288 = vunpack.c.h.b16 %v81
  %v289 = vunpack.c.l.b16 %v82
  %v290 = vunpack.c.h.b16 %v82
  %v291 = vunpack.c.l.b16 %v83
  %v292 = vunpack.c.h.b16 %v83
  %v293 = vunpack.c.l.b16 %v84
  %v294 = vunpack.c.h.b16 %v84
  %v295 = vunpack.c.l.b16 %v85
  %v296 = vunpack.c.h.b16 %v85
  %v297 = vunpack.c.l.b16 %v86
  %v298 = vunpack.c.h.b16 %v86
  %v299 = vunpack.c.l.b16 %v87
  %v300 = vunpack.c.h.b16 %v87
  %v301 = vunpack.c.l.b16 %v88
  %v302 = vunpack.c.h.b16 %v88
  %v303 = vunpack.c.l.b16 %v89
  %v304 = vunpack.c.h.b16 %v89
  %v305 = vunpack.c.l.b16 %v90
  %v306 = vunpack.c.h.b16 %v90
  %v307 = vunpack.c.l.b16 %v91
  %v308 = vunpack.c.h.b16 %v91
  %v309 = vunpack.c.l.b16 %v92
  %v310 = vunpack.c.h.b16 %v92
  %v311 = vunpack.c.l.b16 %v93
  %v312 = vunpack.c.h.b16 %v93
  %v313 = vunpack.c.l.b16 %v94
  %v314 = vunpack.c.h.b16 %v94
  %v315 = vunpack.c.l.b16 %v95
  %v316 = vunpack.c.h.b16 %v95
  %v317 = vunpack.c.l.b16 %v96
  %v318 = vunpack.c.h.b16 %v96
  %v319 = vunpack.c.l.b16 %v97
  %v320 = vunpack.c.h.b16 %v97
  %v321 = vunpack.c.l.b16 %v98
  %v322 = vunpack.c.h.b16 %v98
  %v323 = vunpack.c.l.b16 %v99
  %v324 = vunpack.c.h.b16 %v99
  %v325 = vunpack.c.l.b16 %v100
  %v326 = vunpack.c.h.b16 %v100
  %v327 = vunpack.c.l.b16 %v101
  %v328 = vunpack.c.h.b16 %v101
  %v329 = vunpack.c.l.b16 %v102
  %v330 = vunpack.c.h.b16 %v102
  %v331 = vunpack.c.l.b16 %v103
  %v332 = vunpack.c.h.b16 %v103
  %v333 = vunpack.c.l.b16 %v104
  %v334 = vunpack.c.h.b16 %v104
  %v335 = vunpack.c.l.b16 %v105
  %v336 = vunpack.c.h.b16 %v105
  %v337 = vunpack.c.l.b16 %v106
  %v338 = vunpack.c.h.b16 %v106
  %v339 = vunpack.c.l.b16 %v107
  %v340 = vunpack.c.h.b16 %v107
  %v341 = vunpack.c.l.b16 %v108
  %v342 = vunpack.c.h.b16 %v108
  %v343 = vpack.c.b16 %v223, %v215
  %v344 = vpack.c.b16 %v224, %v216
  %v345 = vpack.c.b16 %v225, %v217
  %v346 = vpack.c.b16 %v226, %v218
  %v347 = vpack.c.b16 %v227, %v219
  %v348 = vpack.c.b16 %v228, %v220
  %v349 = vpack.c.b16 %v229, %v221
  %v350 = vpack.c.b16 %v230, %v222
  %v351 = vpack.c.b16 %v239, %v231
  %v352 = vpack.c.b16 %v240, %v232
  %v353 = vpack.c.b16 %v241, %v233
  %v354 = vpack.c.b16 %v242, %v234
  %v355 = vpack.c.b16 %v243, %v235
  %v356 = vpack.c.b16 %v244, %v236
  %v357 = vpack.c.b16 %v245, %v237
  %v358 = vpack.c.b16 %v246, %v238
  %v359 = vpack.c.b16 %v255, %v247
  %v360 = vpack.c.b16 %v256, %v248
  %v361 = vpack.c.b16 %v257, %v249
  %v362 = vpack.c.b16 %v258, %v250
  %v363 = vpack.c.b16 %v259, %v251
  %v364 = vpack.c.b16 %v260, %v252
  %v365 = vpack.c.b16 %v261, %v253
  %v366 = vpack.c.b16 %v262, %v254
  %v367 = vpack.c.b16 %v271, %v263
  %v368 = vpack.c.b16 %v272, %v264
  %v369 = vpack.c.b16 %v273, %v265
  %v370 = vpack.c.b16 %v274, %v266
  %v371 = vpack.c.b16 %v275, %v267
  %v372 = vpack.c.b16 %v276, %v268
  %v373 = vpack.c.b16 %v277, %v269
  %v374 = vpack.c.b16 %v278, %v270
  %v375 = vpack.c.b16 %v287, %v279
  %v376 = vpack.c.b16 %v288, %v280
  %v377 = vpack.c.b16 %v289, %v281
  %v378 = vpack.c.b16 %v290, %v282
  %v379 = vpack.c.b16 %v291, %v283
  %v380 = vpack.c.b16 %v292, %v284
  %v381 = vpack.c.b16 %v293, %v285
  %v382 = vpack.c.b16 %v294, %v286
  %v383 = vpack.c.b16 %v303, %v295
  %v384 = vpack.c.b16 %v304, %v296
  %v385 = vpack.c.b16 %v305, %v297
  %v386 = vpack.c.b16 %v306, %v298
  %v387 = vpack.c.b16 %v307, %v299
  %v388 = vpack.c.b16 %v308, %v300
  %v389 = vpack.c.b16 %v309, %v301
  %v390 = vpack.c.b16 %v310, %v302
  %v391 = vpack.c.b16 %v319, %v311
  %v392 = vpack.c.b16 %v320, %v312
  %v393 = vpack.c.b16 %v321, %v313
  %v394 = vpack.c.b16 %v322, %v314
  %v395 = vpack.c.b16 %v323, %v315
  %v396 = vpack.c.b16 %v324, %v316
  %v397 = vpack.c.b16 %v325, %v317
  %v398 = vpack.c.b16 %v326, %v318
  %v399 = vpack.c.b16 %v335, %v327
  %v400 = vpack.c.b16 %v336, %v328
  %v401 = vpack.c.b16 %v337, %v329
  %v402 = vpack.c.b16 %v338, %v330
  %v403 = vpack.c.b16 %v339, %v331
  %v404 = vpack.c.b16 %v340, %v332
  %v405 = vpack.c.b16 %v341, %v333
  %v406 = vpack.c.b16 %v342, %v334
  %471 = vmatprep.subr.bf16.mxu0 %v344
  %472 = vmatpush1.bf16.msra.mxu0 %v343
  %473 = vmatprep.subr.bf16.mxu0 %v352
  %474 = vmatpush1.bf16.msra.mxu0 %v351
  %475 = vmatprep.subr.bf16.mxu0 %v360
  %476 = vmatpush1.bf16.msra.mxu0 %v359
  %477 = vmatprep.subr.bf16.mxu0 %v368
  %478 = vmatpush1.bf16.msra.mxu0 %v367
  %479 = vmatprep.subr.bf16.mxu0 %v376
  %480 = vmatpush1.bf16.msra.mxu0 %v375
  %481 = vmatprep.subr.bf16.mxu0 %v384
  %482 = vmatpush1.bf16.msra.mxu0 %v383
  %483 = vmatprep.subr.bf16.mxu0 %v392
  %484 = vmatpush1.bf16.msra.mxu0 %v391
  %485 = vmatprep.subr.bf16.mxu0 %v400
  %486 = vmatpush1.bf16.msra.mxu0 %v399
  %487 = vmatprep.subr.bf16.mxu0 0
  %488 = vmatpush1.bf16.msra.mxu0 0
  %489 = vmatprep.subr.bf16.mxu0 0
  %490 = vmatpush1.bf16.msra.mxu0 0
  %491 = vmatprep.subr.bf16.mxu0 0
  %492 = vmatpush1.bf16.msra.mxu0 0
  %493 = vmatprep.subr.bf16.mxu0 0
  %494 = vmatpush1.bf16.msra.mxu0 0
  %495 = vmatprep.subr.bf16.mxu0 0
  %496 = vmatpush1.bf16.msra.mxu0 0
  %497 = vmatprep.subr.bf16.mxu0 0
  %498 = vmatpush1.bf16.msra.mxu0 0
  %499 = vmatprep.subr.bf16.mxu0 0
  %500 = vmatpush1.bf16.msra.mxu0 0
  %501 = vmatprep.subr.bf16.mxu0 0
  %502 = vmatpush1.bf16.msra.mxu0 0
  %503 = vmatprep.mubr.bf16.mxu0 0
  %504 = vmatmul.mubr.bf16.gmra.mrb[0].mxu0 %v44
  %v505 = vpop.f32.mrb[0].mxu0
  %v506 = vadd.f32 %v114, %v505
  %v507 = vpop.f32.mrb[0].mxu0
  %v508 = vadd.f32 %v118, %v507
  %v509 = vpop.f32.mrb[0].mxu0
  %v510 = vpop.f32.mrb[0].mxu0
  %511 = vdwg.mxu0
  %512 = vmatprep.subr.bf16.mxu0 %v346
  %513 = vmatpush1.bf16.msra.mxu0 %v345
  %514 = vmatprep.subr.bf16.mxu0 %v354
  %515 = vmatpush1.bf16.msra.mxu0 %v353
  %516 = vmatprep.subr.bf16.mxu0 %v362
  %517 = vmatpush1.bf16.msra.mxu0 %v361
  %518 = vmatprep.subr.bf16.mxu0 %v370
  %519 = vmatpush1.bf16.msra.mxu0 %v369
  %520 = vmatprep.subr.bf16.mxu0 %v378
  %521 = vmatpush1.bf16.msra.mxu0 %v377
  %522 = vmatprep.subr.bf16.mxu0 %v386
  %523 = vmatpush1.bf16.msra.mxu0 %v385
  %524 = vmatprep.subr.bf16.mxu0 %v394
  %525 = vmatpush1.bf16.msra.mxu0 %v393
  %526 = vmatprep.subr.bf16.mxu0 %v402
  %527 = vmatpush1.bf16.msra.mxu0 %v401
  %528 = vmatprep.subr.bf16.mxu0 0
  %529 = vmatpush1.bf16.msra.mxu0 0
  %530 = vmatprep.subr.bf16.mxu0 0
  %531 = vmatpush1.bf16.msra.mxu0 0
  %532 = vmatprep.subr.bf16.mxu0 0
  %533 = vmatpush1.bf16.msra.mxu0 0
  %534 = vmatprep.subr.bf16.mxu0 0
  %535 = vmatpush1.bf16.msra.mxu0 0
  %536 = vmatprep.subr.bf16.mxu0 0
  %537 = vmatpush1.bf16.msra.mxu0 0
  %538 = vmatprep.subr.bf16.mxu0 0
  %539 = vmatpush1.bf16.msra.mxu0 0
  %540 = vmatprep.subr.bf16.mxu0 0
  %541 = vmatpush1.bf16.msra.mxu0 0
  %542 = vmatprep.subr.bf16.mxu0 0
  %543 = vmatpush1.bf16.msra.mxu0 0
  %544 = vmatprep.mubr.bf16.mxu0 0
  %545 = vmatmul.mubr.bf16.gmra.mrb[0].mxu0 %v44
  %v546 = vpop.f32.mrb[0].mxu0
  %v547 = vadd.f32 %v122, %v546
  %v548 = vpop.f32.mrb[0].mxu0
  %v549 = vadd.f32 %v126, %v548
  %v550 = vpop.f32.mrb[0].mxu0
  %v551 = vpop.f32.mrb[0].mxu0
  %552 = vdwg.mxu0
  %553 = vmatprep.subr.bf16.mxu0 %v348
  %554 = vmatpush1.bf16.msra.mxu0 %v347
  %555 = vmatprep.subr.bf16.mxu0 %v356
  %556 = vmatpush1.bf16.msra.mxu0 %v355
  %557 = vmatprep.subr.bf16.mxu0 %v364
  %558 = vmatpush1.bf16.msra.mxu0 %v363
  %559 = vmatprep.subr.bf16.mxu0 %v372
  %560 = vmatpush1.bf16.msra.mxu0 %v371
  %561 = vmatprep.subr.bf16.mxu0 %v380
  %562 = vmatpush1.bf16.msra.mxu0 %v379
  %563 = vmatprep.subr.bf16.mxu0 %v388
  %564 = vmatpush1.bf16.msra.mxu0 %v387
  %565 = vmatprep.subr.bf16.mxu0 %v396
  %566 = vmatpush1.bf16.msra.mxu0 %v395
  %567 = vmatprep.subr.bf16.mxu0 %v404
  %568 = vmatpush1.bf16.msra.mxu0 %v403
  %569 = vmatprep.subr.bf16.mxu0 0
  %570 = vmatpush1.bf16.msra.mxu0 0
  %571 = vmatprep.subr.bf16.mxu0 0
  %572 = vmatpush1.bf16.msra.mxu0 0
  %573 = vmatprep.subr.bf16.mxu0 0
  %574 = vmatpush1.bf16.msra.mxu0 0
  %575 = vmatprep.subr.bf16.mxu0 0
  %576 = vmatpush1.bf16.msra.mxu0 0
  %577 = vmatprep.subr.bf16.mxu0 0
  %578 = vmatpush1.bf16.msra.mxu0 0
  %579 = vmatprep.subr.bf16.mxu0 0
  %580 = vmatpush1.bf16.msra.mxu0 0
  %581 = vmatprep.subr.bf16.mxu0 0
  %582 = vmatpush1.bf16.msra.mxu0 0
  %583 = vmatprep.subr.bf16.mxu0 0
  %584 = vmatpush1.bf16.msra.mxu0 0
  %585 = vmatprep.mubr.bf16.mxu0 0
  %586 = vmatmul.mubr.bf16.gmra.mrb[0].mxu0 %v44
  %v587 = vpop.f32.mrb[0].mxu0
  %v588 = vadd.f32 %v130, %v587
  %v589 = vpop.f32.mrb[0].mxu0
  %v590 = vadd.f32 %v134, %v589
  %v591 = vpop.f32.mrb[0].mxu0
  %v592 = vpop.f32.mrb[0].mxu0
  %593 = vdwg.mxu0
  %594 = vmatprep.subr.bf16.mxu0 %v350
  %595 = vmatpush1.bf16.msra.mxu0 %v349
  %596 = vmatprep.subr.bf16.mxu0 %v358
  %597 = vmatpush1.bf16.msra.mxu0 %v357
  %598 = vmatprep.subr.bf16.mxu0 %v366
  %599 = vmatpush1.bf16.msra.mxu0 %v365
  %600 = vmatprep.subr.bf16.mxu0 %v374
  %601 = vmatpush1.bf16.msra.mxu0 %v373
  %602 = vmatprep.subr.bf16.mxu0 %v382
  %603 = vmatpush1.bf16.msra.mxu0 %v381
  %604 = vmatprep.subr.bf16.mxu0 %v390
  %605 = vmatpush1.bf16.msra.mxu0 %v389
  %606 = vmatprep.subr.bf16.mxu0 %v398
  %607 = vmatpush1.bf16.msra.mxu0 %v397
  %608 = vmatprep.subr.bf16.mxu0 %v406
  %609 = vmatpush1.bf16.msra.mxu0 %v405
  %610 = vmatprep.subr.bf16.mxu0 0
  %611 = vmatpush1.bf16.msra.mxu0 0
  %612 = vmatprep.subr.bf16.mxu0 0
  %613 = vmatpush1.bf16.msra.mxu0 0
  %614 = vmatprep.subr.bf16.mxu0 0
  %615 = vmatpush1.bf16.msra.mxu0 0
  %616 = vmatprep.subr.bf16.mxu0 0
  %617 = vmatpush1.bf16.msra.mxu0 0
  %618 = vmatprep.subr.bf16.mxu0 0
  %619 = vmatpush1.bf16.msra.mxu0 0
  %620 = vmatprep.subr.bf16.mxu0 0
  %621 = vmatpush1.bf16.msra.mxu0 0
  %622 = vmatprep.subr.bf16.mxu0 0
  %623 = vmatpush1.bf16.msra.mxu0 0
  %624 = vmatprep.subr.bf16.mxu0 0
  %625 = vmatpush1.bf16.msra.mxu0 0
  %626 = vmatprep.mubr.bf16.mxu0 0
  %627 = vmatmul.mubr.bf16.gmra.mrb[0].mxu0 %v44
  %v628 = vpop.f32.mrb[0].mxu0
  %v629 = vadd.f32 %v138, %v628
  %v630 = vpop.f32.mrb[0].mxu0
  %v631 = vadd.f32 %v142, %v630
  %v632 = vpop.f32.mrb[0].mxu0
  %v633 = vpop.f32.mrb[0].mxu0
  %634 = vdwg.mxu0
  %v635 = vld [vmem:[%s1] sm:$0xff]
  %v636 = vld [vmem:[%s1 + $0x8] sm:$0xff]
  %v637 = vld [vmem:[%s1 + $0x10] sm:$0xff]
  %v638 = vld [vmem:[%s1 + $0x18] sm:$0xff]
  %v639 = vld [vmem:[%s1 + $0x20] sm:$0xff]
  %v640 = vld [vmem:[%s1 + $0x28] sm:$0xff]
  %v641 = vld [vmem:[%s1 + $0x30] sm:$0xff]
  %v642 = vld [vmem:[%s1 + $0x38] sm:$0xff]
  %v643 = vmul.f32 %v506, 1.4285715
  %v644 = vmul.f32 %v508, 1.4285715
  %v645 = vmul.f32 %v547, 1.4285715
  %v646 = vmul.f32 %v549, 1.4285715
  %v647 = vmul.f32 %v588, 1.4285715
  %v648 = vmul.f32 %v590, 1.4285715
  %v649 = vmul.f32 %v629, 1.4285715
  %v650 = vmul.f32 %v631, 1.4285715
  %vm651 = vcmp.gt.f32.partialorder %v506, 0.0
  %vm652 = vcmp.gt.f32.partialorder %v508, 0.0
  %vm653 = vcmp.gt.f32.partialorder %v547, 0.0
  %vm654 = vcmp.gt.f32.partialorder %v549, 0.0
  %vm655 = vcmp.gt.f32.partialorder %v588, 0.0
  %vm656 = vcmp.gt.f32.partialorder %v590, 0.0
  %vm657 = vcmp.gt.f32.partialorder %v629, 0.0
  %vm658 = vcmp.gt.f32.partialorder %v631, 0.0
  %v659 = vmul.f32 %v643, 0.2
  %v660 = vmul.f32 %v644, 0.2
  %v661 = vmul.f32 %v645, 0.2
  %v662 = vmul.f32 %v646, 0.2
  %v663 = vmul.f32 %v647, 0.2
  %v664 = vmul.f32 %v648, 0.2
  %v665 = vmul.f32 %v649, 0.2
  %v666 = vmul.f32 %v650, 0.2
  %v667 = vsel %vm651, %v643, %v659
  %v668 = vsel %vm652, %v644, %v660
  %v669 = vsel %vm653, %v645, %v661
  %v670 = vsel %vm654, %v646, %v662
  %v671 = vsel %vm655, %v647, %v663
  %v672 = vsel %vm656, %v648, %v664
  %v673 = vsel %vm657, %v649, %v665
  %v674 = vsel %vm658, %v650, %v666
  %vm675 = vcmp.ge.u32.totalorder %v635, 1288490188
  %vm676 = vcmp.ge.u32.totalorder %v636, 1288490188
  %vm677 = vcmp.ge.u32.totalorder %v637, 1288490188
  %vm678 = vcmp.ge.u32.totalorder %v638, 1288490188
  %vm679 = vcmp.ge.u32.totalorder %v639, 1288490188
  %vm680 = vcmp.ge.u32.totalorder %v640, 1288490188
  %vm681 = vcmp.ge.u32.totalorder %v641, 1288490188
  %vm682 = vcmp.ge.u32.totalorder %v642, 1288490188
  %v683 = vsel %vm675, %v667, 0.0
  %v684 = vsel %vm676, %v668, 0.0
  %v685 = vsel %vm677, %v669, 0.0
  %v686 = vsel %vm678, %v670, 0.0
  %v687 = vsel %vm679, %v671, 0.0
  %v688 = vsel %vm680, %v672, 0.0
  %v689 = vsel %vm681, %v673, 0.0
  %v690 = vsel %vm682, %v674, 0.0
  %v691 = vpack.c.bf16 %v683, %v683
  %v692 = vpack.c.bf16 %v684, %v684
  %v693 = vpack.c.bf16 %v685, %v685
  %v694 = vpack.c.bf16 %v686, %v686
  %v695 = vpack.c.bf16 %v687, %v687
  %v696 = vpack.c.bf16 %v688, %v688
  %v697 = vpack.c.bf16 %v689, %v689
  %v698 = vpack.c.bf16 %v690, %v690
  %v699 = vld [vmem:[%s6] sm:$0xff]
  %v700 = vld [vmem:[%s6 + $0x8] sm:$0xff]
  %v701 = vld [vmem:[%s6 + $0x10] sm:$0xff]
  %v702 = vld [vmem:[%s6 + $0x18] sm:$0xff]
  %v703 = vld [vmem:[%s6 + $0x20] sm:$0xff]
  %v704 = vld [vmem:[%s6 + $0x28] sm:$0xff]
  %v705 = vld [vmem:[%s6 + $0x30] sm:$0xff]
  %v706 = vld [vmem:[%s6 + $0x38] sm:$0xff]
  %v707 = vld [vmem:[%s6 + $0x40] sm:$0xff]
  %v708 = vld [vmem:[%s6 + $0x48] sm:$0xff]
  %v709 = vld [vmem:[%s6 + $0x50] sm:$0xff]
  %v710 = vld [vmem:[%s6 + $0x58] sm:$0xff]
  %v711 = vld [vmem:[%s6 + $0x60] sm:$0xff]
  %v712 = vld [vmem:[%s6 + $0x68] sm:$0xff]
  %v713 = vld [vmem:[%s6 + $0x70] sm:$0xff]
  %v714 = vld [vmem:[%s6 + $0x78] sm:$0xff]
  %v715 = vld [vmem:[%s6 + $0x80] sm:$0xff]
  %v716 = vld [vmem:[%s6 + $0x88] sm:$0xff]
  %v717 = vld [vmem:[%s6 + $0x90] sm:$0xff]
  %v718 = vld [vmem:[%s6 + $0x98] sm:$0xff]
  %v719 = vld [vmem:[%s6 + $0xa0] sm:$0xff]
  %v720 = vld [vmem:[%s6 + $0xa8] sm:$0xff]
  %v721 = vld [vmem:[%s6 + $0xb0] sm:$0xff]
  %v722 = vld [vmem:[%s6 + $0xb8] sm:$0xff]
  %v723 = vld [vmem:[%s6 + $0xc0] sm:$0xff]
  %v724 = vld [vmem:[%s6 + $0xc8] sm:$0xff]
  %v725 = vld [vmem:[%s6 + $0xd0] sm:$0xff]
  %v726 = vld [vmem:[%s6 + $0xd8] sm:$0xff]
  %v727 = vld [vmem:[%s6 + $0xe0] sm:$0xff]
  %v728 = vld [vmem:[%s6 + $0xe8] sm:$0xff]
  %v729 = vld [vmem:[%s6 + $0xf0] sm:$0xff]
  %v730 = vld [vmem:[%s6 + $0xf8] sm:$0xff]
  %v731 = vld [vmem:[%s6 + $0x100] sm:$0xff]
  %v732 = vld [vmem:[%s6 + $0x108] sm:$0xff]
  %v733 = vld [vmem:[%s6 + $0x110] sm:$0xff]
  %v734 = vld [vmem:[%s6 + $0x118] sm:$0xff]
  %v735 = vld [vmem:[%s6 + $0x120] sm:$0xff]
  %v736 = vld [vmem:[%s6 + $0x128] sm:$0xff]
  %v737 = vld [vmem:[%s6 + $0x130] sm:$0xff]
  %v738 = vld [vmem:[%s6 + $0x138] sm:$0xff]
  %v739 = vld [vmem:[%s6 + $0x140] sm:$0xff]
  %v740 = vld [vmem:[%s6 + $0x148] sm:$0xff]
  %v741 = vld [vmem:[%s6 + $0x150] sm:$0xff]
  %v742 = vld [vmem:[%s6 + $0x158] sm:$0xff]
  %v743 = vld [vmem:[%s6 + $0x160] sm:$0xff]
  %v744 = vld [vmem:[%s6 + $0x168] sm:$0xff]
  %v745 = vld [vmem:[%s6 + $0x170] sm:$0xff]
  %v746 = vld [vmem:[%s6 + $0x178] sm:$0xff]
  %v747 = vld [vmem:[%s6 + $0x180] sm:$0xff]
  %v748 = vld [vmem:[%s6 + $0x188] sm:$0xff]
  %v749 = vld [vmem:[%s6 + $0x190] sm:$0xff]
  %v750 = vld [vmem:[%s6 + $0x198] sm:$0xff]
  %v751 = vld [vmem:[%s6 + $0x1a0] sm:$0xff]
  %v752 = vld [vmem:[%s6 + $0x1a8] sm:$0xff]
  %v753 = vld [vmem:[%s6 + $0x1b0] sm:$0xff]
  %v754 = vld [vmem:[%s6 + $0x1b8] sm:$0xff]
  %v755 = vld [vmem:[%s6 + $0x1c0] sm:$0xff]
  %v756 = vld [vmem:[%s6 + $0x1c8] sm:$0xff]
  %v757 = vld [vmem:[%s6 + $0x1d0] sm:$0xff]
  %v758 = vld [vmem:[%s6 + $0x1d8] sm:$0xff]
  %v759 = vld [vmem:[%s6 + $0x1e0] sm:$0xff]
  %v760 = vld [vmem:[%s6 + $0x1e8] sm:$0xff]
  %v761 = vld [vmem:[%s6 + $0x1f0] sm:$0xff]
  %v762 = vld [vmem:[%s6 + $0x1f8] sm:$0xff]
  %v763 = vld [vmem:[%s6 + $0x200] sm:$0xff]
  %v764 = vld [vmem:[%s6 + $0x208] sm:$0xff]
  %v765 = vld [vmem:[%s6 + $0x210] sm:$0xff]
  %v766 = vld [vmem:[%s6 + $0x218] sm:$0xff]
  %v767 = vld [vmem:[%s6 + $0x220] sm:$0xff]
  %v768 = vld [vmem:[%s6 + $0x228] sm:$0xff]
  %v769 = vld [vmem:[%s6 + $0x230] sm:$0xff]
  %v770 = vld [vmem:[%s6 + $0x238] sm:$0xff]
  %v771 = vld [vmem:[%s6 + $0x240] sm:$0xff]
  %v772 = vld [vmem:[%s6 + $0x248] sm:$0xff]
  %v773 = vld [vmem:[%s6 + $0x250] sm:$0xff]
  %v774 = vld [vmem:[%s6 + $0x258] sm:$0xff]
  %v775 = vld [vmem:[%s6 + $0x260] sm:$0xff]
  %v776 = vld [vmem:[%s6 + $0x268] sm:$0xff]
  %v777 = vld [vmem:[%s6 + $0x270] sm:$0xff]
  %v778 = vld [vmem:[%s6 + $0x278] sm:$0xff]
  %v779 = vld [vmem:[%s6 + $0x280] sm:$0xff]
  %v780 = vld [vmem:[%s6 + $0x288] sm:$0xff]
  %v781 = vld [vmem:[%s6 + $0x290] sm:$0xff]
  %v782 = vld [vmem:[%s6 + $0x298] sm:$0xff]
  %v783 = vld [vmem:[%s6 + $0x2a0] sm:$0xff]
  %v784 = vld [vmem:[%s6 + $0x2a8] sm:$0xff]
  %v785 = vld [vmem:[%s6 + $0x2b0] sm:$0xff]
  %v786 = vld [vmem:[%s6 + $0x2b8] sm:$0xff]
  %v787 = vld [vmem:[%s6 + $0x2c0] sm:$0xff]
  %v788 = vld [vmem:[%s6 + $0x2c8] sm:$0xff]
  %v789 = vld [vmem:[%s6 + $0x2d0] sm:$0xff]
  %v790 = vld [vmem:[%s6 + $0x2d8] sm:$0xff]
  %v791 = vld [vmem:[%s6 + $0x2e0] sm:$0xff]
  %v792 = vld [vmem:[%s6 + $0x2e8] sm:$0xff]
  %v793 = vld [vmem:[%s6 + $0x2f0] sm:$0xff]
  %v794 = vld [vmem:[%s6 + $0x2f8] sm:$0xff]
  %v795 = vld [vmem:[%s6 + $0x300] sm:$0xff]
  %v796 = vld [vmem:[%s6 + $0x308] sm:$0xff]
  %v797 = vld [vmem:[%s6 + $0x310] sm:$0xff]
  %v798 = vld [vmem:[%s6 + $0x318] sm:$0xff]
  %v799 = vld [vmem:[%s6 + $0x320] sm:$0xff]
  %v800 = vld [vmem:[%s6 + $0x328] sm:$0xff]
  %v801 = vld [vmem:[%s6 + $0x330] sm:$0xff]
  %v802 = vld [vmem:[%s6 + $0x338] sm:$0xff]
  %v803 = vld [vmem:[%s6 + $0x340] sm:$0xff]
  %v804 = vld [vmem:[%s6 + $0x348] sm:$0xff]
  %v805 = vld [vmem:[%s6 + $0x350] sm:$0xff]
  %v806 = vld [vmem:[%s6 + $0x358] sm:$0xff]
  %v807 = vld [vmem:[%s6 + $0x360] sm:$0xff]
  %v808 = vld [vmem:[%s6 + $0x368] sm:$0xff]
  %v809 = vld [vmem:[%s6 + $0x370] sm:$0xff]
  %v810 = vld [vmem:[%s6 + $0x378] sm:$0xff]
  %v811 = vld [vmem:[%s6 + $0x380] sm:$0xff]
  %v812 = vld [vmem:[%s6 + $0x388] sm:$0xff]
  %v813 = vld [vmem:[%s6 + $0x390] sm:$0xff]
  %v814 = vld [vmem:[%s6 + $0x398] sm:$0xff]
  %v815 = vld [vmem:[%s6 + $0x3a0] sm:$0xff]
  %v816 = vld [vmem:[%s6 + $0x3a8] sm:$0xff]
  %v817 = vld [vmem:[%s6 + $0x3b0] sm:$0xff]
  %v818 = vld [vmem:[%s6 + $0x3b8] sm:$0xff]
  %v819 = vld [vmem:[%s6 + $0x3c0] sm:$0xff]
  %v820 = vld [vmem:[%s6 + $0x3c8] sm:$0xff]
  %v821 = vld [vmem:[%s6 + $0x3d0] sm:$0xff]
  %v822 = vld [vmem:[%s6 + $0x3d8] sm:$0xff]
  %v823 = vld [vmem:[%s6 + $0x3e0] sm:$0xff]
  %v824 = vld [vmem:[%s6 + $0x3e8] sm:$0xff]
  %v825 = vld [vmem:[%s6 + $0x3f0] sm:$0xff]
  %v826 = vld [vmem:[%s6 + $0x3f8] sm:$0xff]
  %v827 = vld [vmem:[%s6 + $0x400] sm:$0xff]
  %v828 = vld [vmem:[%s6 + $0x408] sm:$0xff]
  %v829 = vld [vmem:[%s6 + $0x410] sm:$0xff]
  %v830 = vld [vmem:[%s6 + $0x418] sm:$0xff]
  %v831 = vld [vmem:[%s6 + $0x420] sm:$0xff]
  %v832 = vld [vmem:[%s6 + $0x428] sm:$0xff]
  %v833 = vld [vmem:[%s6 + $0x430] sm:$0xff]
  %v834 = vld [vmem:[%s6 + $0x438] sm:$0xff]
  %v835 = vld [vmem:[%s6 + $0x440] sm:$0xff]
  %v836 = vld [vmem:[%s6 + $0x448] sm:$0xff]
  %v837 = vld [vmem:[%s6 + $0x450] sm:$0xff]
  %v838 = vld [vmem:[%s6 + $0x458] sm:$0xff]
  %v839 = vld [vmem:[%s6 + $0x460] sm:$0xff]
  %v840 = vld [vmem:[%s6 + $0x468] sm:$0xff]
  %v841 = vld [vmem:[%s6 + $0x470] sm:$0xff]
  %v842 = vld [vmem:[%s6 + $0x478] sm:$0xff]
  %v843 = vld [vmem:[%s6 + $0x480] sm:$0xff]
  %v844 = vld [vmem:[%s6 + $0x488] sm:$0xff]
  %v845 = vld [vmem:[%s6 + $0x490] sm:$0xff]
  %v846 = vld [vmem:[%s6 + $0x498] sm:$0xff]
  %v847 = vld [vmem:[%s6 + $0x4a0] sm:$0xff]
  %v848 = vld [vmem:[%s6 + $0x4a8] sm:$0xff]
  %v849 = vld [vmem:[%s6 + $0x4b0] sm:$0xff]
  %v850 = vld [vmem:[%s6 + $0x4b8] sm:$0xff]
  %v851 = vld [vmem:[%s6 + $0x4c0] sm:$0xff]
  %v852 = vld [vmem:[%s6 + $0x4c8] sm:$0xff]
  %v853 = vld [vmem:[%s6 + $0x4d0] sm:$0xff]
  %v854 = vld [vmem:[%s6 + $0x4d8] sm:$0xff]
  %v855 = vld [vmem:[%s6 + $0x4e0] sm:$0xff]
  %v856 = vld [vmem:[%s6 + $0x4e8] sm:$0xff]
  %v857 = vld [vmem:[%s6 + $0x4f0] sm:$0xff]
  %v858 = vld [vmem:[%s6 + $0x4f8] sm:$0xff]
  %v859 = vld [vmem:[%s6 + $0x500] sm:$0xff]
  %v860 = vld [vmem:[%s6 + $0x508] sm:$0xff]
  %v861 = vld [vmem:[%s6 + $0x510] sm:$0xff]
  %v862 = vld [vmem:[%s6 + $0x518] sm:$0xff]
  %v863 = vld [vmem:[%s6 + $0x520] sm:$0xff]
  %v864 = vld [vmem:[%s6 + $0x528] sm:$0xff]
  %v865 = vld [vmem:[%s6 + $0x530] sm:$0xff]
  %v866 = vld [vmem:[%s6 + $0x538] sm:$0xff]
  %v867 = vld [vmem:[%s6 + $0x540] sm:$0xff]
  %v868 = vld [vmem:[%s6 + $0x548] sm:$0xff]
  %v869 = vld [vmem:[%s6 + $0x550] sm:$0xff]
  %v870 = vld [vmem:[%s6 + $0x558] sm:$0xff]
  %v871 = vld [vmem:[%s6 + $0x560] sm:$0xff]
  %v872 = vld [vmem:[%s6 + $0x568] sm:$0xff]
  %v873 = vld [vmem:[%s6 + $0x570] sm:$0xff]
  %v874 = vld [vmem:[%s6 + $0x578] sm:$0xff]
  %v875 = vld [vmem:[%s6 + $0x580] sm:$0xff]
  %v876 = vld [vmem:[%s6 + $0x588] sm:$0xff]
  %v877 = vld [vmem:[%s6 + $0x590] sm:$0xff]
  %v878 = vld [vmem:[%s6 + $0x598] sm:$0xff]
  %v879 = vld [vmem:[%s6 + $0x5a0] sm:$0xff]
  %v880 = vld [vmem:[%s6 + $0x5a8] sm:$0xff]
  %v881 = vld [vmem:[%s6 + $0x5b0] sm:$0xff]
  %v882 = vld [vmem:[%s6 + $0x5b8] sm:$0xff]
  %v883 = vld [vmem:[%s6 + $0x5c0] sm:$0xff]
  %v884 = vld [vmem:[%s6 + $0x5c8] sm:$0xff]
  %v885 = vld [vmem:[%s6 + $0x5d0] sm:$0xff]
  %v886 = vld [vmem:[%s6 + $0x5d8] sm:$0xff]
  %v887 = vld [vmem:[%s6 + $0x5e0] sm:$0xff]
  %v888 = vld [vmem:[%s6 + $0x5e8] sm:$0xff]
  %v889 = vld [vmem:[%s6 + $0x5f0] sm:$0xff]
  %v890 = vld [vmem:[%s6 + $0x5f8] sm:$0xff]
  %v891 = vld [vmem:[%s6 + $0x600] sm:$0xff]
  %v892 = vld [vmem:[%s6 + $0x608] sm:$0xff]
  %v893 = vld [vmem:[%s6 + $0x610] sm:$0xff]
  %v894 = vld [vmem:[%s6 + $0x618] sm:$0xff]
  %v895 = vld [vmem:[%s6 + $0x620] sm:$0xff]
  %v896 = vld [vmem:[%s6 + $0x628] sm:$0xff]
  %v897 = vld [vmem:[%s6 + $0x630] sm:$0xff]
  %v898 = vld [vmem:[%s6 + $0x638] sm:$0xff]
  %v899 = vld [vmem:[%s6 + $0x640] sm:$0xff]
  %v900 = vld [vmem:[%s6 + $0x648] sm:$0xff]
  %v901 = vld [vmem:[%s6 + $0x650] sm:$0xff]
  %v902 = vld [vmem:[%s6 + $0x658] sm:$0xff]
  %v903 = vld [vmem:[%s6 + $0x660] sm:$0xff]
  %v904 = vld [vmem:[%s6 + $0x668] sm:$0xff]
  %v905 = vld [vmem:[%s6 + $0x670] sm:$0xff]
  %v906 = vld [vmem:[%s6 + $0x678] sm:$0xff]
  %v907 = vld [vmem:[%s6 + $0x680] sm:$0xff]
  %v908 = vld [vmem:[%s6 + $0x688] sm:$0xff]
  %v909 = vld [vmem:[%s6 + $0x690] sm:$0xff]
  %v910 = vld [vmem:[%s6 + $0x698] sm:$0xff]
  %v911 = vld [vmem:[%s6 + $0x6a0] sm:$0xff]
  %v912 = vld [vmem:[%s6 + $0x6a8] sm:$0xff]
  %v913 = vld [vmem:[%s6 + $0x6b0] sm:$0xff]
  %v914 = vld [vmem:[%s6 + $0x6b8] sm:$0xff]
  %v915 = vld [vmem:[%s6 + $0x6c0] sm:$0xff]
  %v916 = vld [vmem:[%s6 + $0x6c8] sm:$0xff]
  %v917 = vld [vmem:[%s6 + $0x6d0] sm:$0xff]
  %v918 = vld [vmem:[%s6 + $0x6d8] sm:$0xff]
  %v919 = vld [vmem:[%s6 + $0x6e0] sm:$0xff]
  %v920 = vld [vmem:[%s6 + $0x6e8] sm:$0xff]
  %v921 = vld [vmem:[%s6 + $0x6f0] sm:$0xff]
  %v922 = vld [vmem:[%s6 + $0x6f8] sm:$0xff]
  %v923 = vld [vmem:[%s6 + $0x700] sm:$0xff]
  %v924 = vld [vmem:[%s6 + $0x708] sm:$0xff]
  %v925 = vld [vmem:[%s6 + $0x710] sm:$0xff]
  %v926 = vld [vmem:[%s6 + $0x718] sm:$0xff]
  %v927 = vld [vmem:[%s6 + $0x720] sm:$0xff]
  %v928 = vld [vmem:[%s6 + $0x728] sm:$0xff]
  %v929 = vld [vmem:[%s6 + $0x730] sm:$0xff]
  %v930 = vld [vmem:[%s6 + $0x738] sm:$0xff]
  %v931 = vld [vmem:[%s6 + $0x740] sm:$0xff]
  %v932 = vld [vmem:[%s6 + $0x748] sm:$0xff]
  %v933 = vld [vmem:[%s6 + $0x750] sm:$0xff]
  %v934 = vld [vmem:[%s6 + $0x758] sm:$0xff]
  %v935 = vld [vmem:[%s6 + $0x760] sm:$0xff]
  %v936 = vld [vmem:[%s6 + $0x768] sm:$0xff]
  %v937 = vld [vmem:[%s6 + $0x770] sm:$0xff]
  %v938 = vld [vmem:[%s6 + $0x778] sm:$0xff]
  %v939 = vld [vmem:[%s6 + $0x780] sm:$0xff]
  %v940 = vld [vmem:[%s6 + $0x788] sm:$0xff]
  %v941 = vld [vmem:[%s6 + $0x790] sm:$0xff]
  %v942 = vld [vmem:[%s6 + $0x798] sm:$0xff]
  %v943 = vld [vmem:[%s6 + $0x7a0] sm:$0xff]
  %v944 = vld [vmem:[%s6 + $0x7a8] sm:$0xff]
  %v945 = vld [vmem:[%s6 + $0x7b0] sm:$0xff]
  %v946 = vld [vmem:[%s6 + $0x7b8] sm:$0xff]
  %v947 = vld [vmem:[%s6 + $0x7c0] sm:$0xff]
  %v948 = vld [vmem:[%s6 + $0x7c8] sm:$0xff]
  %v949 = vld [vmem:[%s6 + $0x7d0] sm:$0xff]
  %v950 = vld [vmem:[%s6 + $0x7d8] sm:$0xff]
  %v951 = vld [vmem:[%s6 + $0x7e0] sm:$0xff]
  %v952 = vld [vmem:[%s6 + $0x7e8] sm:$0xff]
  %v953 = vld [vmem:[%s6 + $0x7f0] sm:$0xff]
  %v954 = vld [vmem:[%s6 + $0x7f8] sm:$0xff]
  %v955 = vld [vmem:[%s7] sm:$0xf]
  %v957 = vlaneseq
  %v958 = vshrl.u32 %v957, 7
  %v959 = vsub.s32 0, %v958
  %v960 = vrot.slane %v955, %v959
  %v961 = vlaneseq
  %v962 = vshrl.u32 %v961, 7
  %v963 = vsub.s32 1, %v962
  %v964 = vrot.slane %v955, %v963
  %v965 = vlaneseq
  %v966 = vshrl.u32 %v965, 7
  %v967 = vsub.s32 2, %v966
  %v968 = vrot.slane %v955, %v967
  %v969 = vlaneseq
  %v970 = vshrl.u32 %v969, 7
  %v971 = vsub.s32 3, %v970
  %v972 = vrot.slane %v955, %v971
  %v1233 = vunpack.c.l.b16 %v699
  %v1234 = vunpack.c.h.b16 %v699
  %v1235 = vunpack.c.l.b16 %v700
  %v1236 = vunpack.c.h.b16 %v700
  %v1237 = vunpack.c.l.b16 %v701
  %v1238 = vunpack.c.h.b16 %v701
  %v1239 = vunpack.c.l.b16 %v702
  %v1240 = vunpack.c.h.b16 %v702
  %v1241 = vunpack.c.l.b16 %v703
  %v1242 = vunpack.c.h.b16 %v703
  %v1243 = vunpack.c.l.b16 %v704
  %v1244 = vunpack.c.h.b16 %v704
  %v1245 = vunpack.c.l.b16 %v705
  %v1246 = vunpack.c.h.b16 %v705
  %v1247 = vunpack.c.l.b16 %v706
  %v1248 = vunpack.c.h.b16 %v706
  %v1249 = vunpack.c.l.b16 %v707
  %v1250 = vunpack.c.h.b16 %v707
  %v1251 = vunpack.c.l.b16 %v708
  %v1252 = vunpack.c.h.b16 %v708
  %v1253 = vunpack.c.l.b16 %v709
  %v1254 = vunpack.c.h.b16 %v709
  %v1255 = vunpack.c.l.b16 %v710
  %v1256 = vunpack.c.h.b16 %v710
  %v1257 = vunpack.c.l.b16 %v711
  %v1258 = vunpack.c.h.b16 %v711
  %v1259 = vunpack.c.l.b16 %v712
  %v1260 = vunpack.c.h.b16 %v712
  %v1261 = vunpack.c.l.b16 %v713
  %v1262 = vunpack.c.h.b16 %v713
  %v1263 = vunpack.c.l.b16 %v714
  %v1264 = vunpack.c.h.b16 %v714
  %v1265 = vunpack.c.l.b16 %v715
  %v1266 = vunpack.c.h.b16 %v715
  %v1267 = vunpack.c.l.b16 %v716
  %v1268 = vunpack.c.h.b16 %v716
  %v1269 = vunpack.c.l.b16 %v717
  %v1270 = vunpack.c.h.b16 %v717
  %v1271 = vunpack.c.l.b16 %v718
  %v1272 = vunpack.c.h.b16 %v718
  %v1273 = vunpack.c.l.b16 %v719
  %v1274 = vunpack.c.h.b16 %v719
  %v1275 = vunpack.c.l.b16 %v720
  %v1276 = vunpack.c.h.b16 %v720
  %v1277 = vunpack.c.l.b16 %v721
  %v1278 = vunpack.c.h.b16 %v721
  %v1279 = vunpack.c.l.b16 %v722
  %v1280 = vunpack.c.h.b16 %v722
  %v1281 = vunpack.c.l.b16 %v723
  %v1282 = vunpack.c.h.b16 %v723
  %v1283 = vunpack.c.l.b16 %v724
  %v1284 = vunpack.c.h.b16 %v724
  %v1285 = vunpack.c.l.b16 %v725
  %v1286 = vunpack.c.h.b16 %v725
  %v1287 = vunpack.c.l.b16 %v726
  %v1288 = vunpack.c.h.b16 %v726
  %v1289 = vunpack.c.l.b16 %v727
  %v1290 = vunpack.c.h.b16 %v727
  %v1291 = vunpack.c.l.b16 %v728
  %v1292 = vunpack.c.h.b16 %v728
  %v1293 = vunpack.c.l.b16 %v729
  %v1294 = vunpack.c.h.b16 %v729
  %v1295 = vunpack.c.l.b16 %v730
  %v1296 = vunpack.c.h.b16 %v730
  %v1297 = vunpack.c.l.b16 %v731
  %v1298 = vunpack.c.h.b16 %v731
  %v1299 = vunpack.c.l.b16 %v732
  %v1300 = vunpack.c.h.b16 %v732
  %v1301 = vunpack.c.l.b16 %v733
  %v1302 = vunpack.c.h.b16 %v733
  %v1303 = vunpack.c.l.b16 %v734
  %v1304 = vunpack.c.h.b16 %v734
  %v1305 = vunpack.c.l.b16 %v735
  %v1306 = vunpack.c.h.b16 %v735
  %v1307 = vunpack.c.l.b16 %v736
  %v1308 = vunpack.c.h.b16 %v736
  %v1309 = vunpack.c.l.b16 %v737
  %v1310 = vunpack.c.h.b16 %v737
  %v1311 = vunpack.c.l.b16 %v738
  %v1312 = vunpack.c.h.b16 %v738
  %v1313 = vunpack.c.l.b16 %v739
  %v1314 = vunpack.c.h.b16 %v739
  %v1315 = vunpack.c.l.b16 %v740
  %v1316 = vunpack.c.h.b16 %v740
  %v1317 = vunpack.c.l.b16 %v741
  %v1318 = vunpack.c.h.b16 %v741
  %v1319 = vunpack.c.l.b16 %v742
  %v1320 = vunpack.c.h.b16 %v742
  %v1321 = vunpack.c.l.b16 %v743
  %v1322 = vunpack.c.h.b16 %v743
  %v1323 = vunpack.c.l.b16 %v744
  %v1324 = vunpack.c.h.b16 %v744
  %v1325 = vunpack.c.l.b16 %v745
  %v1326 = vunpack.c.h.b16 %v745
  %v1327 = vunpack.c.l.b16 %v746
  %v1328 = vunpack.c.h.b16 %v746
  %v1329 = vunpack.c.l.b16 %v747
  %v1330 = vunpack.c.h.b16 %v747
  %v1331 = vunpack.c.l.b16 %v748
  %v1332 = vunpack.c.h.b16 %v748
  %v1333 = vunpack.c.l.b16 %v749
  %v1334 = vunpack.c.h.b16 %v749
  %v1335 = vunpack.c.l.b16 %v750
  %v1336 = vunpack.c.h.b16 %v750
  %v1337 = vunpack.c.l.b16 %v751
  %v1338 = vunpack.c.h.b16 %v751
  %v1339 = vunpack.c.l.b16 %v752
  %v1340 = vunpack.c.h.b16 %v752
  %v1341 = vunpack.c.l.b16 %v753
  %v1342 = vunpack.c.h.b16 %v753
  %v1343 = vunpack.c.l.b16 %v754
  %v1344 = vunpack.c.h.b16 %v754
  %v1345 = vunpack.c.l.b16 %v755
  %v1346 = vunpack.c.h.b16 %v755
  %v1347 = vunpack.c.l.b16 %v756
  %v1348 = vunpack.c.h.b16 %v756
  %v1349 = vunpack.c.l.b16 %v757
  %v1350 = vunpack.c.h.b16 %v757
  %v1351 = vunpack.c.l.b16 %v758
  %v1352 = vunpack.c.h.b16 %v758
  %v1353 = vunpack.c.l.b16 %v759
  %v1354 = vunpack.c.h.b16 %v759
  %v1355 = vunpack.c.l.b16 %v760
  %v1356 = vunpack.c.h.b16 %v760
  %v1357 = vunpack.c.l.b16 %v761
  %v1358 = vunpack.c.h.b16 %v761
  %v1359 = vunpack.c.l.b16 %v762
  %v1360 = vunpack.c.h.b16 %v762
  %v1361 = vunpack.c.l.b16 %v763
  %v1362 = vunpack.c.h.b16 %v763
  %v1363 = vunpack.c.l.b16 %v764
  %v1364 = vunpack.c.h.b16 %v764
  %v1365 = vunpack.c.l.b16 %v765
  %v1366 = vunpack.c.h.b16 %v765
  %v1367 = vunpack.c.l.b16 %v766
  %v1368 = vunpack.c.h.b16 %v766
  %v1369 = vunpack.c.l.b16 %v767
  %v1370 = vunpack.c.h.b16 %v767
  %v1371 = vunpack.c.l.b16 %v768
  %v1372 = vunpack.c.h.b16 %v768
  %v1373 = vunpack.c.l.b16 %v769
  %v1374 = vunpack.c.h.b16 %v769
  %v1375 = vunpack.c.l.b16 %v770
  %v1376 = vunpack.c.h.b16 %v770
  %v1377 = vunpack.c.l.b16 %v771
  %v1378 = vunpack.c.h.b16 %v771
  %v1379 = vunpack.c.l.b16 %v772
  %v1380 = vunpack.c.h.b16 %v772
  %v1381 = vunpack.c.l.b16 %v773
  %v1382 = vunpack.c.h.b16 %v773
  %v1383 = vunpack.c.l.b16 %v774
  %v1384 = vunpack.c.h.b16 %v774
  %v1385 = vunpack.c.l.b16 %v775
  %v1386 = vunpack.c.h.b16 %v775
  %v1387 = vunpack.c.l.b16 %v776
  %v1388 = vunpack.c.h.b16 %v776
  %v1389 = vunpack.c.l.b16 %v777
  %v1390 = vunpack.c.h.b16 %v777
  %v1391 = vunpack.c.l.b16 %v778
  %v1392 = vunpack.c.h.b16 %v778
  %v1393 = vunpack.c.l.b16 %v779
  %v1394 = vunpack.c.h.b16 %v779
  %v1395 = vunpack.c.l.b16 %v780
  %v1396 = vunpack.c.h.b16 %v780
  %v1397 = vunpack.c.l.b16 %v781
  %v1398 = vunpack.c.h.b16 %v781
  %v1399 = vunpack.c.l.b16 %v782
  %v1400 = vunpack.c.h.b16 %v782
  %v1401 = vunpack.c.l.b16 %v783
  %v1402 = vunpack.c.h.b16 %v783
  %v1403 = vunpack.c.l.b16 %v784
  %v1404 = vunpack.c.h.b16 %v784
  %v1405 = vunpack.c.l.b16 %v785
  %v1406 = vunpack.c.h.b16 %v785
  %v1407 = vunpack.c.l.b16 %v786
  %v1408 = vunpack.c.h.b16 %v786
  %v1409 = vunpack.c.l.b16 %v787
  %v1410 = vunpack.c.h.b16 %v787
  %v1411 = vunpack.c.l.b16 %v788
  %v1412 = vunpack.c.h.b16 %v788
  %v1413 = vunpack.c.l.b16 %v789
  %v1414 = vunpack.c.h.b16 %v789
  %v1415 = vunpack.c.l.b16 %v790
  %v1416 = vunpack.c.h.b16 %v790
  %v1417 = vunpack.c.l.b16 %v791
  %v1418 = vunpack.c.h.b16 %v791
  %v1419 = vunpack.c.l.b16 %v792
  %v1420 = vunpack.c.h.b16 %v792
  %v1421 = vunpack.c.l.b16 %v793
  %v1422 = vunpack.c.h.b16 %v793
  %v1423 = vunpack.c.l.b16 %v794
  %v1424 = vunpack.c.h.b16 %v794
  %v1425 = vunpack.c.l.b16 %v795
  %v1426 = vunpack.c.h.b16 %v795
  %v1427 = vunpack.c.l.b16 %v796
  %v1428 = vunpack.c.h.b16 %v796
  %v1429 = vunpack.c.l.b16 %v797
  %v1430 = vunpack.c.h.b16 %v797
  %v1431 = vunpack.c.l.b16 %v798
  %v1432 = vunpack.c.h.b16 %v798
  %v1433 = vunpack.c.l.b16 %v799
  %v1434 = vunpack.c.h.b16 %v799
  %v1435 = vunpack.c.l.b16 %v800
  %v1436 = vunpack.c.h.b16 %v800
  %v1437 = vunpack.c.l.b16 %v801
  %v1438 = vunpack.c.h.b16 %v801
  %v1439 = vunpack.c.l.b16 %v802
  %v1440 = vunpack.c.h.b16 %v802
  %v1441 = vunpack.c.l.b16 %v803
  %v1442 = vunpack.c.h.b16 %v803
  %v1443 = vunpack.c.l.b16 %v804
  %v1444 = vunpack.c.h.b16 %v804
  %v1445 = vunpack.c.l.b16 %v805
  %v1446 = vunpack.c.h.b16 %v805
  %v1447 = vunpack.c.l.b16 %v806
  %v1448 = vunpack.c.h.b16 %v806
  %v1449 = vunpack.c.l.b16 %v807
  %v1450 = vunpack.c.h.b16 %v807
  %v1451 = vunpack.c.l.b16 %v808
  %v1452 = vunpack.c.h.b16 %v808
  %v1453 = vunpack.c.l.b16 %v809
  %v1454 = vunpack.c.h.b16 %v809
  %v1455 = vunpack.c.l.b16 %v810
  %v1456 = vunpack.c.h.b16 %v810
  %v1457 = vunpack.c.l.b16 %v811
  %v1458 = vunpack.c.h.b16 %v811
  %v1459 = vunpack.c.l.b16 %v812
  %v1460 = vunpack.c.h.b16 %v812
  %v1461 = vunpack.c.l.b16 %v813
  %v1462 = vunpack.c.h.b16 %v813
  %v1463 = vunpack.c.l.b16 %v814
  %v1464 = vunpack.c.h.b16 %v814
  %v1465 = vunpack.c.l.b16 %v815
  %v1466 = vunpack.c.h.b16 %v815
  %v1467 = vunpack.c.l.b16 %v816
  %v1468 = vunpack.c.h.b16 %v816
  %v1469 = vunpack.c.l.b16 %v817
  %v1470 = vunpack.c.h.b16 %v817
  %v1471 = vunpack.c.l.b16 %v818
  %v1472 = vunpack.c.h.b16 %v818
  %v1473 = vunpack.c.l.b16 %v819
  %v1474 = vunpack.c.h.b16 %v819
  %v1475 = vunpack.c.l.b16 %v820
  %v1476 = vunpack.c.h.b16 %v820
  %v1477 = vunpack.c.l.b16 %v821
  %v1478 = vunpack.c.h.b16 %v821
  %v1479 = vunpack.c.l.b16 %v822
  %v1480 = vunpack.c.h.b16 %v822
  %v1481 = vunpack.c.l.b16 %v823
  %v1482 = vunpack.c.h.b16 %v823
  %v1483 = vunpack.c.l.b16 %v824
  %v1484 = vunpack.c.h.b16 %v824
  %v1485 = vunpack.c.l.b16 %v825
  %v1486 = vunpack.c.h.b16 %v825
  %v1487 = vunpack.c.l.b16 %v826
  %v1488 = vunpack.c.h.b16 %v826
  %v1489 = vunpack.c.l.b16 %v827
  %v1490 = vunpack.c.h.b16 %v827
  %v1491 = vunpack.c.l.b16 %v828
  %v1492 = vunpack.c.h.b16 %v828
  %v1493 = vunpack.c.l.b16 %v829
  %v1494 = vunpack.c.h.b16 %v829
  %v1495 = vunpack.c.l.b16 %v830
  %v1496 = vunpack.c.h.b16 %v830
  %v1497 = vunpack.c.l.b16 %v831
  %v1498 = vunpack.c.h.b16 %v831
  %v1499 = vunpack.c.l.b16 %v832
  %v1500 = vunpack.c.h.b16 %v832
  %v1501 = vunpack.c.l.b16 %v833
  %v1502 = vunpack.c.h.b16 %v833
  %v1503 = vunpack.c.l.b16 %v834
  %v1504 = vunpack.c.h.b16 %v834
  %v1505 = vunpack.c.l.b16 %v835
  %v1506 = vunpack.c.h.b16 %v835
  %v1507 = vunpack.c.l.b16 %v836
  %v1508 = vunpack.c.h.b16 %v836
  %v1509 = vunpack.c.l.b16 %v837
  %v1510 = vunpack.c.h.b16 %v837
  %v1511 = vunpack.c.l.b16 %v838
  %v1512 = vunpack.c.h.b16 %v838
  %v1513 = vunpack.c.l.b16 %v839
  %v1514 = vunpack.c.h.b16 %v839
  %v1515 = vunpack.c.l.b16 %v840
  %v1516 = vunpack.c.h.b16 %v840
  %v1517 = vunpack.c.l.b16 %v841
  %v1518 = vunpack.c.h.b16 %v841
  %v1519 = vunpack.c.l.b16 %v842
  %v1520 = vunpack.c.h.b16 %v842
  %v1521 = vunpack.c.l.b16 %v843
  %v1522 = vunpack.c.h.b16 %v843
  %v1523 = vunpack.c.l.b16 %v844
  %v1524 = vunpack.c.h.b16 %v844
  %v1525 = vunpack.c.l.b16 %v845
  %v1526 = vunpack.c.h.b16 %v845
  %v1527 = vunpack.c.l.b16 %v846
  %v1528 = vunpack.c.h.b16 %v846
  %v1529 = vunpack.c.l.b16 %v847
  %v1530 = vunpack.c.h.b16 %v847
  %v1531 = vunpack.c.l.b16 %v848
  %v1532 = vunpack.c.h.b16 %v848
  %v1533 = vunpack.c.l.b16 %v849
  %v1534 = vunpack.c.h.b16 %v849
  %v1535 = vunpack.c.l.b16 %v850
  %v1536 = vunpack.c.h.b16 %v850
  %v1537 = vunpack.c.l.b16 %v851
  %v1538 = vunpack.c.h.b16 %v851
  %v1539 = vunpack.c.l.b16 %v852
  %v1540 = vunpack.c.h.b16 %v852
  %v1541 = vunpack.c.l.b16 %v853
  %v1542 = vunpack.c.h.b16 %v853
  %v1543 = vunpack.c.l.b16 %v854
  %v1544 = vunpack.c.h.b16 %v854
  %v1545 = vunpack.c.l.b16 %v855
  %v1546 = vunpack.c.h.b16 %v855
  %v1547 = vunpack.c.l.b16 %v856
  %v1548 = vunpack.c.h.b16 %v856
  %v1549 = vunpack.c.l.b16 %v857
  %v1550 = vunpack.c.h.b16 %v857
  %v1551 = vunpack.c.l.b16 %v858
  %v1552 = vunpack.c.h.b16 %v858
  %v1553 = vunpack.c.l.b16 %v859
  %v1554 = vunpack.c.h.b16 %v859
  %v1555 = vunpack.c.l.b16 %v860
  %v1556 = vunpack.c.h.b16 %v860
  %v1557 = vunpack.c.l.b16 %v861
  %v1558 = vunpack.c.h.b16 %v861
  %v1559 = vunpack.c.l.b16 %v862
  %v1560 = vunpack.c.h.b16 %v862
  %v1561 = vunpack.c.l.b16 %v863
  %v1562 = vunpack.c.h.b16 %v863
  %v1563 = vunpack.c.l.b16 %v864
  %v1564 = vunpack.c.h.b16 %v864
  %v1565 = vunpack.c.l.b16 %v865
  %v1566 = vunpack.c.h.b16 %v865
  %v1567 = vunpack.c.l.b16 %v866
  %v1568 = vunpack.c.h.b16 %v866
  %v1569 = vunpack.c.l.b16 %v867
  %v1570 = vunpack.c.h.b16 %v867
  %v1571 = vunpack.c.l.b16 %v868
  %v1572 = vunpack.c.h.b16 %v868
  %v1573 = vunpack.c.l.b16 %v869
  %v1574 = vunpack.c.h.b16 %v869
  %v1575 = vunpack.c.l.b16 %v870
  %v1576 = vunpack.c.h.b16 %v870
  %v1577 = vunpack.c.l.b16 %v871
  %v1578 = vunpack.c.h.b16 %v871
  %v1579 = vunpack.c.l.b16 %v872
  %v1580 = vunpack.c.h.b16 %v872
  %v1581 = vunpack.c.l.b16 %v873
  %v1582 = vunpack.c.h.b16 %v873
  %v1583 = vunpack.c.l.b16 %v874
  %v1584 = vunpack.c.h.b16 %v874
  %v1585 = vunpack.c.l.b16 %v875
  %v1586 = vunpack.c.h.b16 %v875
  %v1587 = vunpack.c.l.b16 %v876
  %v1588 = vunpack.c.h.b16 %v876
  %v1589 = vunpack.c.l.b16 %v877
  %v1590 = vunpack.c.h.b16 %v877
  %v1591 = vunpack.c.l.b16 %v878
  %v1592 = vunpack.c.h.b16 %v878
  %v1593 = vunpack.c.l.b16 %v879
  %v1594 = vunpack.c.h.b16 %v879
  %v1595 = vunpack.c.l.b16 %v880
  %v1596 = vunpack.c.h.b16 %v880
  %v1597 = vunpack.c.l.b16 %v881
  %v1598 = vunpack.c.h.b16 %v881
  %v1599 = vunpack.c.l.b16 %v882
  %v1600 = vunpack.c.h.b16 %v882
  %v1601 = vunpack.c.l.b16 %v883
  %v1602 = vunpack.c.h.b16 %v883
  %v1603 = vunpack.c.l.b16 %v884
  %v1604 = vunpack.c.h.b16 %v884
  %v1605 = vunpack.c.l.b16 %v885
  %v1606 = vunpack.c.h.b16 %v885
  %v1607 = vunpack.c.l.b16 %v886
  %v1608 = vunpack.c.h.b16 %v886
  %v1609 = vunpack.c.l.b16 %v887
  %v1610 = vunpack.c.h.b16 %v887
  %v1611 = vunpack.c.l.b16 %v888
  %v1612 = vunpack.c.h.b16 %v888
  %v1613 = vunpack.c.l.b16 %v889
  %v1614 = vunpack.c.h.b16 %v889
  %v1615 = vunpack.c.l.b16 %v890
  %v1616 = vunpack.c.h.b16 %v890
  %v1617 = vunpack.c.l.b16 %v891
  %v1618 = vunpack.c.h.b16 %v891
  %v1619 = vunpack.c.l.b16 %v892
  %v1620 = vunpack.c.h.b16 %v892
  %v1621 = vunpack.c.l.b16 %v893
  %v1622 = vunpack.c.h.b16 %v893
  %v1623 = vunpack.c.l.b16 %v894
  %v1624 = vunpack.c.h.b16 %v894
  %v1625 = vunpack.c.l.b16 %v895
  %v1626 = vunpack.c.h.b16 %v895
  %v1627 = vunpack.c.l.b16 %v896
  %v1628 = vunpack.c.h.b16 %v896
  %v1629 = vunpack.c.l.b16 %v897
  %v1630 = vunpack.c.h.b16 %v897
  %v1631 = vunpack.c.l.b16 %v898
  %v1632 = vunpack.c.h.b16 %v898
  %v1633 = vunpack.c.l.b16 %v899
  %v1634 = vunpack.c.h.b16 %v899
  %v1635 = vunpack.c.l.b16 %v900
  %v1636 = vunpack.c.h.b16 %v900
  %v1637 = vunpack.c.l.b16 %v901
  %v1638 = vunpack.c.h.b16 %v901
  %v1639 = vunpack.c.l.b16 %v902
  %v1640 = vunpack.c.h.b16 %v902
  %v1641 = vunpack.c.l.b16 %v903
  %v1642 = vunpack.c.h.b16 %v903
  %v1643 = vunpack.c.l.b16 %v904
  %v1644 = vunpack.c.h.b16 %v904
  %v1645 = vunpack.c.l.b16 %v905
  %v1646 = vunpack.c.h.b16 %v905
  %v1647 = vunpack.c.l.b16 %v906
  %v1648 = vunpack.c.h.b16 %v906
  %v1649 = vunpack.c.l.b16 %v907
  %v1650 = vunpack.c.h.b16 %v907
  %v1651 = vunpack.c.l.b16 %v908
  %v1652 = vunpack.c.h.b16 %v908
  %v1653 = vunpack.c.l.b16 %v909
  %v1654 = vunpack.c.h.b16 %v909
  %v1655 = vunpack.c.l.b16 %v910
  %v1656 = vunpack.c.h.b16 %v910
  %v1657 = vunpack.c.l.b16 %v911
  %v1658 = vunpack.c.h.b16 %v911
  %v1659 = vunpack.c.l.b16 %v912
  %v1660 = vunpack.c.h.b16 %v912
  %v1661 = vunpack.c.l.b16 %v913
  %v1662 = vunpack.c.h.b16 %v913
  %v1663 = vunpack.c.l.b16 %v914
  %v1664 = vunpack.c.h.b16 %v914
  %v1665 = vunpack.c.l.b16 %v915
  %v1666 = vunpack.c.h.b16 %v915
  %v1667 = vunpack.c.l.b16 %v916
  %v1668 = vunpack.c.h.b16 %v916
  %v1669 = vunpack.c.l.b16 %v917
  %v1670 = vunpack.c.h.b16 %v917
  %v1671 = vunpack.c.l.b16 %v918
  %v1672 = vunpack.c.h.b16 %v918
  %v1673 = vunpack.c.l.b16 %v919
  %v1674 = vunpack.c.h.b16 %v919
  %v1675 = vunpack.c.l.b16 %v920
  %v1676 = vunpack.c.h.b16 %v920
  %v1677 = vunpack.c.l.b16 %v921
  %v1678 = vunpack.c.h.b16 %v921
  %v1679 = vunpack.c.l.b16 %v922
  %v1680 = vunpack.c.h.b16 %v922
  %v1681 = vunpack.c.l.b16 %v923
  %v1682 = vunpack.c.h.b16 %v923
  %v1683 = vunpack.c.l.b16 %v924
  %v1684 = vunpack.c.h.b16 %v924
  %v1685 = vunpack.c.l.b16 %v925
  %v1686 = vunpack.c.h.b16 %v925
  %v1687 = vunpack.c.l.b16 %v926
  %v1688 = vunpack.c.h.b16 %v926
  %v1689 = vunpack.c.l.b16 %v927
  %v1690 = vunpack.c.h.b16 %v927
  %v1691 = vunpack.c.l.b16 %v928
  %v1692 = vunpack.c.h.b16 %v928
  %v1693 = vunpack.c.l.b16 %v929
  %v1694 = vunpack.c.h.b16 %v929
  %v1695 = vunpack.c.l.b16 %v930
  %v1696 = vunpack.c.h.b16 %v930
  %v1697 = vunpack.c.l.b16 %v931
  %v1698 = vunpack.c.h.b16 %v931
  %v1699 = vunpack.c.l.b16 %v932
  %v1700 = vunpack.c.h.b16 %v932
  %v1701 = vunpack.c.l.b16 %v933
  %v1702 = vunpack.c.h.b16 %v933
  %v1703 = vunpack.c.l.b16 %v934
  %v1704 = vunpack.c.h.b16 %v934
  %v1705 = vunpack.c.l.b16 %v935
  %v1706 = vunpack.c.h.b16 %v935
  %v1707 = vunpack.c.l.b16 %v936
  %v1708 = vunpack.c.h.b16 %v936
  %v1709 = vunpack.c.l.b16 %v937
  %v1710 = vunpack.c.h.b16 %v937
  %v1711 = vunpack.c.l.b16 %v938
  %v1712 = vunpack.c.h.b16 %v938
  %v1713 = vunpack.c.l.b16 %v939
  %v1714 = vunpack.c.h.b16 %v939
  %v1715 = vunpack.c.l.b16 %v940
  %v1716 = vunpack.c.h.b16 %v940
  %v1717 = vunpack.c.l.b16 %v941
  %v1718 = vunpack.c.h.b16 %v941
  %v1719 = vunpack.c.l.b16 %v942
  %v1720 = vunpack.c.h.b16 %v942
  %v1721 = vunpack.c.l.b16 %v943
  %v1722 = vunpack.c.h.b16 %v943
  %v1723 = vunpack.c.l.b16 %v944
  %v1724 = vunpack.c.h.b16 %v944
  %v1725 = vunpack.c.l.b16 %v945
  %v1726 = vunpack.c.h.b16 %v945
  %v1727 = vunpack.c.l.b16 %v946
  %v1728 = vunpack.c.h.b16 %v946
  %v1729 = vunpack.c.l.b16 %v947
  %v1730 = vunpack.c.h.b16 %v947
  %v1731 = vunpack.c.l.b16 %v948
  %v1732 = vunpack.c.h.b16 %v948
  %v1733 = vunpack.c.l.b16 %v949
  %v1734 = vunpack.c.h.b16 %v949
  %v1735 = vunpack.c.l.b16 %v950
  %v1736 = vunpack.c.h.b16 %v950
  %v1737 = vunpack.c.l.b16 %v951
  %v1738 = vunpack.c.h.b16 %v951
  %v1739 = vunpack.c.l.b16 %v952
  %v1740 = vunpack.c.h.b16 %v952
  %v1741 = vunpack.c.l.b16 %v953
  %v1742 = vunpack.c.h.b16 %v953
  %v1743 = vunpack.c.l.b16 %v954
  %v1744 = vunpack.c.h.b16 %v954
  %v1745 = vpack.c.b16 %v1237, %v1233
  %v1746 = vpack.c.b16 %v1238, %v1234
  %v1747 = vpack.c.b16 %v1239, %v1235
  %v1748 = vpack.c.b16 %v1240, %v1236
  %v1749 = vpack.c.b16 %v1245, %v1241
  %v1750 = vpack.c.b16 %v1246, %v1242
  %v1751 = vpack.c.b16 %v1247, %v1243
  %v1752 = vpack.c.b16 %v1248, %v1244
  %v1753 = vpack.c.b16 %v1253, %v1249
  %v1754 = vpack.c.b16 %v1254, %v1250
  %v1755 = vpack.c.b16 %v1255, %v1251
  %v1756 = vpack.c.b16 %v1256, %v1252
  %v1757 = vpack.c.b16 %v1261, %v1257
  %v1758 = vpack.c.b16 %v1262, %v1258
  %v1759 = vpack.c.b16 %v1263, %v1259
  %v1760 = vpack.c.b16 %v1264, %v1260
  %v1761 = vpack.c.b16 %v1269, %v1265
  %v1762 = vpack.c.b16 %v1270, %v1266
  %v1763 = vpack.c.b16 %v1271, %v1267
  %v1764 = vpack.c.b16 %v1272, %v1268
  %v1765 = vpack.c.b16 %v1277, %v1273
  %v1766 = vpack.c.b16 %v1278, %v1274
  %v1767 = vpack.c.b16 %v1279, %v1275
  %v1768 = vpack.c.b16 %v1280, %v1276
  %v1769 = vpack.c.b16 %v1285, %v1281
  %v1770 = vpack.c.b16 %v1286, %v1282
  %v1771 = vpack.c.b16 %v1287, %v1283
  %v1772 = vpack.c.b16 %v1288, %v1284
  %v1773 = vpack.c.b16 %v1293, %v1289
  %v1774 = vpack.c.b16 %v1294, %v1290
  %v1775 = vpack.c.b16 %v1295, %v1291
  %v1776 = vpack.c.b16 %v1296, %v1292
  %v1777 = vpack.c.b16 %v1301, %v1297
  %v1778 = vpack.c.b16 %v1302, %v1298
  %v1779 = vpack.c.b16 %v1303, %v1299
  %v1780 = vpack.c.b16 %v1304, %v1300
  %v1781 = vpack.c.b16 %v1309, %v1305
  %v1782 = vpack.c.b16 %v1310, %v1306
  %v1783 = vpack.c.b16 %v1311, %v1307
  %v1784 = vpack.c.b16 %v1312, %v1308
  %v1785 = vpack.c.b16 %v1317, %v1313
  %v1786 = vpack.c.b16 %v1318, %v1314
  %v1787 = vpack.c.b16 %v1319, %v1315
  %v1788 = vpack.c.b16 %v1320, %v1316
  %v1789 = vpack.c.b16 %v1325, %v1321
  %v1790 = vpack.c.b16 %v1326, %v1322
  %v1791 = vpack.c.b16 %v1327, %v1323
  %v1792 = vpack.c.b16 %v1328, %v1324
  %v1793 = vpack.c.b16 %v1333, %v1329
  %v1794 = vpack.c.b16 %v1334, %v1330
  %v1795 = vpack.c.b16 %v1335, %v1331
  %v1796 = vpack.c.b16 %v1336, %v1332
  %v1797 = vpack.c.b16 %v1341, %v1337
  %v1798 = vpack.c.b16 %v1342, %v1338
  %v1799 = vpack.c.b16 %v1343, %v1339
  %v1800 = vpack.c.b16 %v1344, %v1340
  %v1801 = vpack.c.b16 %v1349, %v1345
  %v1802 = vpack.c.b16 %v1350, %v1346
  %v1803 = vpack.c.b16 %v1351, %v1347
  %v1804 = vpack.c.b16 %v1352, %v1348
  %v1805 = vpack.c.b16 %v1357, %v1353
  %v1806 = vpack.c.b16 %v1358, %v1354
  %v1807 = vpack.c.b16 %v1359, %v1355
  %v1808 = vpack.c.b16 %v1360, %v1356
  %v1809 = vpack.c.b16 %v1365, %v1361
  %v1810 = vpack.c.b16 %v1366, %v1362
  %v1811 = vpack.c.b16 %v1367, %v1363
  %v1812 = vpack.c.b16 %v1368, %v1364
  %v1813 = vpack.c.b16 %v1373, %v1369
  %v1814 = vpack.c.b16 %v1374, %v1370
  %v1815 = vpack.c.b16 %v1375, %v1371
  %v1816 = vpack.c.b16 %v1376, %v1372
  %v1817 = vpack.c.b16 %v1381, %v1377
  %v1818 = vpack.c.b16 %v1382, %v1378
  %v1819 = vpack.c.b16 %v1383, %v1379
  %v1820 = vpack.c.b16 %v1384, %v1380
  %v1821 = vpack.c.b16 %v1389, %v1385
  %v1822 = vpack.c.b16 %v1390, %v1386
  %v1823 = vpack.c.b16 %v1391, %v1387
  %v1824 = vpack.c.b16 %v1392, %v1388
  %v1825 = vpack.c.b16 %v1397, %v1393
  %v1826 = vpack.c.b16 %v1398, %v1394
  %v1827 = vpack.c.b16 %v1399, %v1395
  %v1828 = vpack.c.b16 %v1400, %v1396
  %v1829 = vpack.c.b16 %v1405, %v1401
  %v1830 = vpack.c.b16 %v1406, %v1402
  %v1831 = vpack.c.b16 %v1407, %v1403
  %v1832 = vpack.c.b16 %v1408, %v1404
  %v1833 = vpack.c.b16 %v1413, %v1409
  %v1834 = vpack.c.b16 %v1414, %v1410
  %v1835 = vpack.c.b16 %v1415, %v1411
  %v1836 = vpack.c.b16 %v1416, %v1412
  %v1837 = vpack.c.b16 %v1421, %v1417
  %v1838 = vpack.c.b16 %v1422, %v1418
  %v1839 = vpack.c.b16 %v1423, %v1419
  %v1840 = vpack.c.b16 %v1424, %v1420
  %v1841 = vpack.c.b16 %v1429, %v1425
  %v1842 = vpack.c.b16 %v1430, %v1426
  %v1843 = vpack.c.b16 %v1431, %v1427
  %v1844 = vpack.c.b16 %v1432, %v1428
  %v1845 = vpack.c.b16 %v1437, %v1433
  %v1846 = vpack.c.b16 %v1438, %v1434
  %v1847 = vpack.c.b16 %v1439, %v1435
  %v1848 = vpack.c.b16 %v1440, %v1436
  %v1849 = vpack.c.b16 %v1445, %v1441
  %v1850 = vpack.c.b16 %v1446, %v1442
  %v1851 = vpack.c.b16 %v1447, %v1443
  %v1852 = vpack.c.b16 %v1448, %v1444
  %v1853 = vpack.c.b16 %v1453, %v1449
  %v1854 = vpack.c.b16 %v1454, %v1450
  %v1855 = vpack.c.b16 %v1455, %v1451
  %v1856 = vpack.c.b16 %v1456, %v1452
  %v1857 = vpack.c.b16 %v1461, %v1457
  %v1858 = vpack.c.b16 %v1462, %v1458
  %v1859 = vpack.c.b16 %v1463, %v1459
  %v1860 = vpack.c.b16 %v1464, %v1460
  %v1861 = vpack.c.b16 %v1469, %v1465
  %v1862 = vpack.c.b16 %v1470, %v1466
  %v1863 = vpack.c.b16 %v1471, %v1467
  %v1864 = vpack.c.b16 %v1472, %v1468
  %v1865 = vpack.c.b16 %v1477, %v1473
  %v1866 = vpack.c.b16 %v1478, %v1474
  %v1867 = vpack.c.b16 %v1479, %v1475
  %v1868 = vpack.c.b16 %v1480, %v1476
  %v1869 = vpack.c.b16 %v1485, %v1481
  %v1870 = vpack.c.b16 %v1486, %v1482
  %v1871 = vpack.c.b16 %v1487, %v1483
  %v1872 = vpack.c.b16 %v1488, %v1484
  %v1873 = vpack.c.b16 %v1493, %v1489
  %v1874 = vpack.c.b16 %v1494, %v1490
  %v1875 = vpack.c.b16 %v1495, %v1491
  %v1876 = vpack.c.b16 %v1496, %v1492
  %v1877 = vpack.c.b16 %v1501, %v1497
  %v1878 = vpack.c.b16 %v1502, %v1498
  %v1879 = vpack.c.b16 %v1503, %v1499
  %v1880 = vpack.c.b16 %v1504, %v1500
  %v1881 = vpack.c.b16 %v1509, %v1505
  %v1882 = vpack.c.b16 %v1510, %v1506
  %v1883 = vpack.c.b16 %v1511, %v1507
  %v1884 = vpack.c.b16 %v1512, %v1508
  %v1885 = vpack.c.b16 %v1517, %v1513
  %v1886 = vpack.c.b16 %v1518, %v1514
  %v1887 = vpack.c.b16 %v1519, %v1515
  %v1888 = vpack.c.b16 %v1520, %v1516
  %v1889 = vpack.c.b16 %v1525, %v1521
  %v1890 = vpack.c.b16 %v1526, %v1522
  %v1891 = vpack.c.b16 %v1527, %v1523
  %v1892 = vpack.c.b16 %v1528, %v1524
  %v1893 = vpack.c.b16 %v1533, %v1529
  %v1894 = vpack.c.b16 %v1534, %v1530
  %v1895 = vpack.c.b16 %v1535, %v1531
  %v1896 = vpack.c.b16 %v1536, %v1532
  %v1897 = vpack.c.b16 %v1541, %v1537
  %v1898 = vpack.c.b16 %v1542, %v1538
  %v1899 = vpack.c.b16 %v1543, %v1539
  %v1900 = vpack.c.b16 %v1544, %v1540
  %v1901 = vpack.c.b16 %v1549, %v1545
  %v1902 = vpack.c.b16 %v1550, %v1546
  %v1903 = vpack.c.b16 %v1551, %v1547
  %v1904 = vpack.c.b16 %v1552, %v1548
  %v1905 = vpack.c.b16 %v1557, %v1553
  %v1906 = vpack.c.b16 %v1558, %v1554
  %v1907 = vpack.c.b16 %v1559, %v1555
  %v1908 = vpack.c.b16 %v1560, %v1556
  %v1909 = vpack.c.b16 %v1565, %v1561
  %v1910 = vpack.c.b16 %v1566, %v1562
  %v1911 = vpack.c.b16 %v1567, %v1563
  %v1912 = vpack.c.b16 %v1568, %v1564
  %v1913 = vpack.c.b16 %v1573, %v1569
  %v1914 = vpack.c.b16 %v1574, %v1570
  %v1915 = vpack.c.b16 %v1575, %v1571
  %v1916 = vpack.c.b16 %v1576, %v1572
  %v1917 = vpack.c.b16 %v1581, %v1577
  %v1918 = vpack.c.b16 %v1582, %v1578
  %v1919 = vpack.c.b16 %v1583, %v1579
  %v1920 = vpack.c.b16 %v1584, %v1580
  %v1921 = vpack.c.b16 %v1589, %v1585
  %v1922 = vpack.c.b16 %v1590, %v1586
  %v1923 = vpack.c.b16 %v1591, %v1587
  %v1924 = vpack.c.b16 %v1592, %v1588
  %v1925 = vpack.c.b16 %v1597, %v1593
  %v1926 = vpack.c.b16 %v1598, %v1594
  %v1927 = vpack.c.b16 %v1599, %v1595
  %v1928 = vpack.c.b16 %v1600, %v1596
  %v1929 = vpack.c.b16 %v1605, %v1601
  %v1930 = vpack.c.b16 %v1606, %v1602
  %v1931 = vpack.c.b16 %v1607, %v1603
  %v1932 = vpack.c.b16 %v1608, %v1604
  %v1933 = vpack.c.b16 %v1613, %v1609
  %v1934 = vpack.c.b16 %v1614, %v1610
  %v1935 = vpack.c.b16 %v1615, %v1611
  %v1936 = vpack.c.b16 %v1616, %v1612
  %v1937 = vpack.c.b16 %v1621, %v1617
  %v1938 = vpack.c.b16 %v1622, %v1618
  %v1939 = vpack.c.b16 %v1623, %v1619
  %v1940 = vpack.c.b16 %v1624, %v1620
  %v1941 = vpack.c.b16 %v1629, %v1625
  %v1942 = vpack.c.b16 %v1630, %v1626
  %v1943 = vpack.c.b16 %v1631, %v1627
  %v1944 = vpack.c.b16 %v1632, %v1628
  %v1945 = vpack.c.b16 %v1637, %v1633
  %v1946 = vpack.c.b16 %v1638, %v1634
  %v1947 = vpack.c.b16 %v1639, %v1635
  %v1948 = vpack.c.b16 %v1640, %v1636
  %v1949 = vpack.c.b16 %v1645, %v1641
  %v1950 = vpack.c.b16 %v1646, %v1642
  %v1951 = vpack.c.b16 %v1647, %v1643
  %v1952 = vpack.c.b16 %v1648, %v1644
  %v1953 = vpack.c.b16 %v1653, %v1649
  %v1954 = vpack.c.b16 %v1654, %v1650
  %v1955 = vpack.c.b16 %v1655, %v1651
  %v1956 = vpack.c.b16 %v1656, %v1652
  %v1957 = vpack.c.b16 %v1661, %v1657
  %v1958 = vpack.c.b16 %v1662, %v1658
  %v1959 = vpack.c.b16 %v1663, %v1659
  %v1960 = vpack.c.b16 %v1664, %v1660
  %v1961 = vpack.c.b16 %v1669, %v1665
  %v1962 = vpack.c.b16 %v1670, %v1666
  %v1963 = vpack.c.b16 %v1671, %v1667
  %v1964 = vpack.c.b16 %v1672, %v1668
  %v1965 = vpack.c.b16 %v1677, %v1673
  %v1966 = vpack.c.b16 %v1678, %v1674
  %v1967 = vpack.c.b16 %v1679, %v1675
  %v1968 = vpack.c.b16 %v1680, %v1676
  %v1969 = vpack.c.b16 %v1685, %v1681
  %v1970 = vpack.c.b16 %v1686, %v1682
  %v1971 = vpack.c.b16 %v1687, %v1683
  %v1972 = vpack.c.b16 %v1688, %v1684
  %v1973 = vpack.c.b16 %v1693, %v1689
  %v1974 = vpack.c.b16 %v1694, %v1690
  %v1975 = vpack.c.b16 %v1695, %v1691
  %v1976 = vpack.c.b16 %v1696, %v1692
  %v1977 = vpack.c.b16 %v1701, %v1697
  %v1978 = vpack.c.b16 %v1702, %v1698
  %v1979 = vpack.c.b16 %v1703, %v1699
  %v1980 = vpack.c.b16 %v1704, %v1700
  %v1981 = vpack.c.b16 %v1709, %v1705
  %v1982 = vpack.c.b16 %v1710, %v1706
  %v1983 = vpack.c.b16 %v1711, %v1707
  %v1984 = vpack.c.b16 %v1712, %v1708
  %v1985 = vpack.c.b16 %v1717, %v1713
  %v1986 = vpack.c.b16 %v1718, %v1714
  %v1987 = vpack.c.b16 %v1719, %v1715
  %v1988 = vpack.c.b16 %v1720, %v1716
  %v1989 = vpack.c.b16 %v1725, %v1721
  %v1990 = vpack.c.b16 %v1726, %v1722
  %v1991 = vpack.c.b16 %v1727, %v1723
  %v1992 = vpack.c.b16 %v1728, %v1724
  %v1993 = vpack.c.b16 %v1733, %v1729
  %v1994 = vpack.c.b16 %v1734, %v1730
  %v1995 = vpack.c.b16 %v1735, %v1731
  %v1996 = vpack.c.b16 %v1736, %v1732
  %v1997 = vpack.c.b16 %v1741, %v1737
  %v1998 = vpack.c.b16 %v1742, %v1738
  %v1999 = vpack.c.b16 %v1743, %v1739
  %v2000 = vpack.c.b16 %v1744, %v1740
  %2257 = vmatprep.subr.bf16.mxu0 %v1746
  %2258 = vmatpush1.bf16.msra.mxu0 %v1745
  %2259 = vmatprep.subr.bf16.mxu0 %v1750
  %2260 = vmatpush1.bf16.msra.mxu0 %v1749
  %2261 = vmatprep.subr.bf16.mxu0 %v1754
  %2262 = vmatpush1.bf16.msra.mxu0 %v1753
  %2263 = vmatprep.subr.bf16.mxu0 %v1758
  %2264 = vmatpush1.bf16.msra.mxu0 %v1757
  %2265 = vmatprep.subr.bf16.mxu0 %v1762
  %2266 = vmatpush1.bf16.msra.mxu0 %v1761
  %2267 = vmatprep.subr.bf16.mxu0 %v1766
  %2268 = vmatpush1.bf16.msra.mxu0 %v1765
  %2269 = vmatprep.subr.bf16.mxu0 %v1770
  %2270 = vmatpush1.bf16.msra.mxu0 %v1769
  %2271 = vmatprep.subr.bf16.mxu0 %v1774
  %2272 = vmatpush1.bf16.msra.mxu0 %v1773
  %2273 = vmatprep.subr.bf16.mxu0 %v1778
  %2274 = vmatpush1.bf16.msra.mxu0 %v1777
  %2275 = vmatprep.subr.bf16.mxu0 %v1782
  %2276 = vmatpush1.bf16.msra.mxu0 %v1781
  %2277 = vmatprep.subr.bf16.mxu0 %v1786
  %2278 = vmatpush1.bf16.msra.mxu0 %v1785
  %2279 = vmatprep.subr.bf16.mxu0 %v1790
  %2280 = vmatpush1.bf16.msra.mxu0 %v1789
  %2281 = vmatprep.subr.bf16.mxu0 %v1794
  %2282 = vmatpush1.bf16.msra.mxu0 %v1793
  %2283 = vmatprep.subr.bf16.mxu0 %v1798
  %2284 = vmatpush1.bf16.msra.mxu0 %v1797
  %2285 = vmatprep.subr.bf16.mxu0 %v1802
  %2286 = vmatpush1.bf16.msra.mxu0 %v1801
  %2287 = vmatprep.subr.bf16.mxu0 %v1806
  %2288 = vmatpush1.bf16.msra.mxu0 %v1805
  %2289 = vmatprep.mubr.bf16.mxu0 %v692
  %2290 = vmatmul.mubr.bf16.gmra.mrb[0].mxu0 %v691
  %v2291 = vpop.f32.mrb[0].mxu0
  %v2292 = vadd.f32 %v960, %v2291
  %v2293 = vpop.f32.mrb[0].mxu0
  %v2294 = vadd.f32 %v964, %v2293
  %v2295 = vpop.f32.mrb[0].mxu0
  %v2296 = vpop.f32.mrb[0].mxu0
  %2297 = vdwg.mxu0
  %2298 = vmatprep.subr.bf16.mxu0 %v1810
  %2299 = vmatpush1.bf16.msra.mxu0 %v1809
  %2300 = vmatprep.subr.bf16.mxu0 %v1814
  %2301 = vmatpush1.bf16.msra.mxu0 %v1813
  %2302 = vmatprep.subr.bf16.mxu0 %v1818
  %2303 = vmatpush1.bf16.msra.mxu0 %v1817
  %2304 = vmatprep.subr.bf16.mxu0 %v1822
  %2305 = vmatpush1.bf16.msra.mxu0 %v1821
  %2306 = vmatprep.subr.bf16.mxu0 %v1826
  %2307 = vmatpush1.bf16.msra.mxu0 %v1825
  %2308 = vmatprep.subr.bf16.mxu0 %v1830
  %2309 = vmatpush1.bf16.msra.mxu0 %v1829
  %2310 = vmatprep.subr.bf16.mxu0 %v1834
  %2311 = vmatpush1.bf16.msra.mxu0 %v1833
  %2312 = vmatprep.subr.bf16.mxu0 %v1838
  %2313 = vmatpush1.bf16.msra.mxu0 %v1837
  %2314 = vmatprep.subr.bf16.mxu0 %v1842
  %2315 = vmatpush1.bf16.msra.mxu0 %v1841
  %2316 = vmatprep.subr.bf16.mxu0 %v1846
  %2317 = vmatpush1.bf16.msra.mxu0 %v1845
  %2318 = vmatprep.subr.bf16.mxu0 %v1850
  %2319 = vmatpush1.bf16.msra.mxu0 %v1849
  %2320 = vmatprep.subr.bf16.mxu0 %v1854
  %2321 = vmatpush1.bf16.msra.mxu0 %v1853
  %2322 = vmatprep.subr.bf16.mxu0 %v1858
  %2323 = vmatpush1.bf16.msra.mxu0 %v1857
  %2324 = vmatprep.subr.bf16.mxu0 %v1862
  %2325 = vmatpush1.bf16.msra.mxu0 %v1861
  %2326 = vmatprep.subr.bf16.mxu0 %v1866
  %2327 = vmatpush1.bf16.msra.mxu0 %v1865
  %2328 = vmatprep.subr.bf16.mxu0 %v1870
  %2329 = vmatpush1.bf16.msra.mxu0 %v1869
  %2330 = vmatprep.mubr.bf16.mxu0 %v694
  %2331 = vmatmul.mubr.bf16.gmra.mrb[0].mxu0 %v693
  %v2332 = vpop.f32.mrb[0].mxu0
  %v2333 = vadd.f32 %v2292, %v2332
  %v2334 = vpop.f32.mrb[0].mxu0
  %v2335 = vadd.f32 %v2294, %v2334
  %v2336 = vpop.f32.mrb[0].mxu0
  %v2337 = vpop.f32.mrb[0].mxu0
  %2338 = vdwg.mxu0
  %2339 = vmatprep.subr.bf16.mxu0 %v1874
  %2340 = vmatpush1.bf16.msra.mxu0 %v1873
  %2341 = vmatprep.subr.bf16.mxu0 %v1878
  %2342 = vmatpush1.bf16.msra.mxu0 %v1877
  %2343 = vmatprep.subr.bf16.mxu0 %v1882
  %2344 = vmatpush1.bf16.msra.mxu0 %v1881
  %2345 = vmatprep.subr.bf16.mxu0 %v1886
  %2346 = vmatpush1.bf16.msra.mxu0 %v1885
  %2347 = vmatprep.subr.bf16.mxu0 %v1890
  %2348 = vmatpush1.bf16.msra.mxu0 %v1889
  %2349 = vmatprep.subr.bf16.mxu0 %v1894
  %2350 = vmatpush1.bf16.msra.mxu0 %v1893
  %2351 = vmatprep.subr.bf16.mxu0 %v1898
  %2352 = vmatpush1.bf16.msra.mxu0 %v1897
  %2353 = vmatprep.subr.bf16.mxu0 %v1902
  %2354 = vmatpush1.bf16.msra.mxu0 %v1901
  %2355 = vmatprep.subr.bf16.mxu0 %v1906
  %2356 = vmatpush1.bf16.msra.mxu0 %v1905
  %2357 = vmatprep.subr.bf16.mxu0 %v1910
  %2358 = vmatpush1.bf16.msra.mxu0 %v1909
  %2359 = vmatprep.subr.bf16.mxu0 %v1914
  %2360 = vmatpush1.bf16.msra.mxu0 %v1913
  %2361 = vmatprep.subr.bf16.mxu0 %v1918
  %2362 = vmatpush1.bf16.msra.mxu0 %v1917
  %2363 = vmatprep.subr.bf16.mxu0 %v1922
  %2364 = vmatpush1.bf16.msra.mxu0 %v1921
  %2365 = vmatprep.subr.bf16.mxu0 %v1926
  %2366 = vmatpush1.bf16.msra.mxu0 %v1925
  %2367 = vmatprep.subr.bf16.mxu0 %v1930
  %2368 = vmatpush1.bf16.msra.mxu0 %v1929
  %2369 = vmatprep.subr.bf16.mxu0 %v1934
  %2370 = vmatpush1.bf16.msra.mxu0 %v1933
  %2371 = vmatprep.mubr.bf16.mxu0 %v696
  %2372 = vmatmul.mubr.bf16.gmra.mrb[0].mxu0 %v695
  %v2373 = vpop.f32.mrb[0].mxu0
  %v2374 = vadd.f32 %v2333, %v2373
  %v2375 = vpop.f32.mrb[0].mxu0
  %v2376 = vadd.f32 %v2335, %v2375
  %v2377 = vpop.f32.mrb[0].mxu0
  %v2378 = vpop.f32.mrb[0].mxu0
  %2379 = vdwg.mxu0
  %2380 = vmatprep.subr.bf16.mxu0 %v1938
  %2381 = vmatpush1.bf16.msra.mxu0 %v1937
  %2382 = vmatprep.subr.bf16.mxu0 %v1942
  %2383 = vmatpush1.bf16.msra.mxu0 %v1941
  %2384 = vmatprep.subr.bf16.mxu0 %v1946
  %2385 = vmatpush1.bf16.msra.mxu0 %v1945
  %2386 = vmatprep.subr.bf16.mxu0 %v1950
  %2387 = vmatpush1.bf16.msra.mxu0 %v1949
  %2388 = vmatprep.subr.bf16.mxu0 %v1954
  %2389 = vmatpush1.bf16.msra.mxu0 %v1953
  %2390 = vmatprep.subr.bf16.mxu0 %v1958
  %2391 = vmatpush1.bf16.msra.mxu0 %v1957
  %2392 = vmatprep.subr.bf16.mxu0 %v1962
  %2393 = vmatpush1.bf16.msra.mxu0 %v1961
  %2394 = vmatprep.subr.bf16.mxu0 %v1966
  %2395 = vmatpush1.bf16.msra.mxu0 %v1965
  %2396 = vmatprep.subr.bf16.mxu0 %v1970
  %2397 = vmatpush1.bf16.msra.mxu0 %v1969
  %2398 = vmatprep.subr.bf16.mxu0 %v1974
  %2399 = vmatpush1.bf16.msra.mxu0 %v1973
  %2400 = vmatprep.subr.bf16.mxu0 %v1978
  %2401 = vmatpush1.bf16.msra.mxu0 %v1977
  %2402 = vmatprep.subr.bf16.mxu0 %v1982
  %2403 = vmatpush1.bf16.msra.mxu0 %v1981
  %2404 = vmatprep.subr.bf16.mxu0 %v1986
  %2405 = vmatpush1.bf16.msra.mxu0 %v1985
  %2406 = vmatprep.subr.bf16.mxu0 %v1990
  %2407 = vmatpush1.bf16.msra.mxu0 %v1989
  %2408 = vmatprep.subr.bf16.mxu0 %v1994
  %2409 = vmatpush1.bf16.msra.mxu0 %v1993
  %2410 = vmatprep.subr.bf16.mxu0 %v1998
  %2411 = vmatpush1.bf16.msra.mxu0 %v1997
  %2412 = vmatprep.mubr.bf16.mxu0 %v698
  %2413 = vmatmul.mubr.bf16.gmra.mrb[0].mxu0 %v697
  %v2414 = vpop.f32.mrb[0].mxu0
  %v2415 = vadd.f32 %v2374, %v2414
  %v2416 = vpop.f32.mrb[0].mxu0
  %v2417 = vadd.f32 %v2376, %v2416
  %v2418 = vpop.f32.mrb[0].mxu0
  %v2419 = vpop.f32.mrb[0].mxu0
  %2420 = vdwg.mxu0
  %2421 = vmatprep.subr.bf16.mxu0 %v1748
  %2422 = vmatpush1.bf16.msra.mxu0 %v1747
  %2423 = vmatprep.subr.bf16.mxu0 %v1752
  %2424 = vmatpush1.bf16.msra.mxu0 %v1751
  %2425 = vmatprep.subr.bf16.mxu0 %v1756
  %2426 = vmatpush1.bf16.msra.mxu0 %v1755
  %2427 = vmatprep.subr.bf16.mxu0 %v1760
  %2428 = vmatpush1.bf16.msra.mxu0 %v1759
  %2429 = vmatprep.subr.bf16.mxu0 %v1764
  %2430 = vmatpush1.bf16.msra.mxu0 %v1763
  %2431 = vmatprep.subr.bf16.mxu0 %v1768
  %2432 = vmatpush1.bf16.msra.mxu0 %v1767
  %2433 = vmatprep.subr.bf16.mxu0 %v1772
  %2434 = vmatpush1.bf16.msra.mxu0 %v1771
  %2435 = vmatprep.subr.bf16.mxu0 %v1776
  %2436 = vmatpush1.bf16.msra.mxu0 %v1775
  %2437 = vmatprep.subr.bf16.mxu0 %v1780
  %2438 = vmatpush1.bf16.msra.mxu0 %v1779
  %2439 = vmatprep.subr.bf16.mxu0 %v1784
  %2440 = vmatpush1.bf16.msra.mxu0 %v1783
  %2441 = vmatprep.subr.bf16.mxu0 %v1788
  %2442 = vmatpush1.bf16.msra.mxu0 %v1787
  %2443 = vmatprep.subr.bf16.mxu0 %v1792
  %2444 = vmatpush1.bf16.msra.mxu0 %v1791
  %2445 = vmatprep.subr.bf16.mxu0 %v1796
  %2446 = vmatpush1.bf16.msra.mxu0 %v1795
  %2447 = vmatprep.subr.bf16.mxu0 %v1800
  %2448 = vmatpush1.bf16.msra.mxu0 %v1799
  %2449 = vmatprep.subr.bf16.mxu0 %v1804
  %2450 = vmatpush1.bf16.msra.mxu0 %v1803
  %2451 = vmatprep.subr.bf16.mxu0 %v1808
  %2452 = vmatpush1.bf16.msra.mxu0 %v1807
  %2453 = vmatprep.mubr.bf16.mxu0 %v692
  %2454 = vmatmul.mubr.bf16.gmra.mrb[0].mxu0 %v691
  %v2455 = vpop.f32.mrb[0].mxu0
  %v2456 = vadd.f32 %v968, %v2455
  %v2457 = vpop.f32.mrb[0].mxu0
  %v2458 = vadd.f32 %v972, %v2457
  %v2459 = vpop.f32.mrb[0].mxu0
  %v2460 = vpop.f32.mrb[0].mxu0
  %2461 = vdwg.mxu0
  %2462 = vmatprep.subr.bf16.mxu0 %v1812
  %2463 = vmatpush1.bf16.msra.mxu0 %v1811
  %2464 = vmatprep.subr.bf16.mxu0 %v1816
  %2465 = vmatpush1.bf16.msra.mxu0 %v1815
  %2466 = vmatprep.subr.bf16.mxu0 %v1820
  %2467 = vmatpush1.bf16.msra.mxu0 %v1819
  %2468 = vmatprep.subr.bf16.mxu0 %v1824
  %2469 = vmatpush1.bf16.msra.mxu0 %v1823
  %2470 = vmatprep.subr.bf16.mxu0 %v1828
  %2471 = vmatpush1.bf16.msra.mxu0 %v1827
  %2472 = vmatprep.subr.bf16.mxu0 %v1832
  %2473 = vmatpush1.bf16.msra.mxu0 %v1831
  %2474 = vmatprep.subr.bf16.mxu0 %v1836
  %2475 = vmatpush1.bf16.msra.mxu0 %v1835
  %2476 = vmatprep.subr.bf16.mxu0 %v1840
  %2477 = vmatpush1.bf16.msra.mxu0 %v1839
  %2478 = vmatprep.subr.bf16.mxu0 %v1844
  %2479 = vmatpush1.bf16.msra.mxu0 %v1843
  %2480 = vmatprep.subr.bf16.mxu0 %v1848
  %2481 = vmatpush1.bf16.msra.mxu0 %v1847
  %2482 = vmatprep.subr.bf16.mxu0 %v1852
  %2483 = vmatpush1.bf16.msra.mxu0 %v1851
  %2484 = vmatprep.subr.bf16.mxu0 %v1856
  %2485 = vmatpush1.bf16.msra.mxu0 %v1855
  %2486 = vmatprep.subr.bf16.mxu0 %v1860
  %2487 = vmatpush1.bf16.msra.mxu0 %v1859
  %2488 = vmatprep.subr.bf16.mxu0 %v1864
  %2489 = vmatpush1.bf16.msra.mxu0 %v1863
  %2490 = vmatprep.subr.bf16.mxu0 %v1868
  %2491 = vmatpush1.bf16.msra.mxu0 %v1867
  %2492 = vmatprep.subr.bf16.mxu0 %v1872
  %2493 = vmatpush1.bf16.msra.mxu0 %v1871
  %2494 = vmatprep.mubr.bf16.mxu0 %v694
  %2495 = vmatmul.mubr.bf16.gmra.mrb[0].mxu0 %v693
  %v2496 = vpop.f32.mrb[0].mxu0
  %v2497 = vadd.f32 %v2456, %v2496
  %v2498 = vpop.f32.mrb[0].mxu0
  %v2499 = vadd.f32 %v2458, %v2498
  %v2500 = vpop.f32.mrb[0].mxu0
  %v2501 = vpop.f32.mrb[0].mxu0
  %2502 = vdwg.mxu0
  %2503 = vmatprep.subr.bf16.mxu0 %v1876
  %2504 = vmatpush1.bf16.msra.mxu0 %v1875
  %2505 = vmatprep.subr.bf16.mxu0 %v1880
  %2506 = vmatpush1.bf16.msra.mxu0 %v1879
  %2507 = vmatprep.subr.bf16.mxu0 %v1884
  %2508 = vmatpush1.bf16.msra.mxu0 %v1883
  %2509 = vmatprep.subr.bf16.mxu0 %v1888
  %2510 = vmatpush1.bf16.msra.mxu0 %v1887
  %2511 = vmatprep.subr.bf16.mxu0 %v1892
  %2512 = vmatpush1.bf16.msra.mxu0 %v1891
  %2513 = vmatprep.subr.bf16.mxu0 %v1896
  %2514 = vmatpush1.bf16.msra.mxu0 %v1895
  %2515 = vmatprep.subr.bf16.mxu0 %v1900
  %2516 = vmatpush1.bf16.msra.mxu0 %v1899
  %2517 = vmatprep.subr.bf16.mxu0 %v1904
  %2518 = vmatpush1.bf16.msra.mxu0 %v1903
  %2519 = vmatprep.subr.bf16.mxu0 %v1908
  %2520 = vmatpush1.bf16.msra.mxu0 %v1907
  %2521 = vmatprep.subr.bf16.mxu0 %v1912
  %2522 = vmatpush1.bf16.msra.mxu0 %v1911
  %2523 = vmatprep.subr.bf16.mxu0 %v1916
  %2524 = vmatpush1.bf16.msra.mxu0 %v1915
  %2525 = vmatprep.subr.bf16.mxu0 %v1920
  %2526 = vmatpush1.bf16.msra.mxu0 %v1919
  %2527 = vmatprep.subr.bf16.mxu0 %v1924
  %2528 = vmatpush1.bf16.msra.mxu0 %v1923
  %2529 = vmatprep.subr.bf16.mxu0 %v1928
  %2530 = vmatpush1.bf16.msra.mxu0 %v1927
  %2531 = vmatprep.subr.bf16.mxu0 %v1932
  %2532 = vmatpush1.bf16.msra.mxu0 %v1931
  %2533 = vmatprep.subr.bf16.mxu0 %v1936
  %2534 = vmatpush1.bf16.msra.mxu0 %v1935
  %2535 = vmatprep.mubr.bf16.mxu0 %v696
  %2536 = vmatmul.mubr.bf16.gmra.mrb[0].mxu0 %v695
  %v2537 = vpop.f32.mrb[0].mxu0
  %v2538 = vadd.f32 %v2497, %v2537
  %v2539 = vpop.f32.mrb[0].mxu0
  %v2540 = vadd.f32 %v2499, %v2539
  %v2541 = vpop.f32.mrb[0].mxu0
  %v2542 = vpop.f32.mrb[0].mxu0
  %2543 = vdwg.mxu0
  %2544 = vmatprep.subr.bf16.mxu0 %v1940
  %2545 = vmatpush1.bf16.msra.mxu0 %v1939
  %2546 = vmatprep.subr.bf16.mxu0 %v1944
  %2547 = vmatpush1.bf16.msra.mxu0 %v1943
  %2548 = vmatprep.subr.bf16.mxu0 %v1948
  %2549 = vmatpush1.bf16.msra.mxu0 %v1947
  %2550 = vmatprep.subr.bf16.mxu0 %v1952
  %2551 = vmatpush1.bf16.msra.mxu0 %v1951
  %2552 = vmatprep.subr.bf16.mxu0 %v1956
  %2553 = vmatpush1.bf16.msra.mxu0 %v1955
  %2554 = vmatprep.subr.bf16.mxu0 %v1960
  %2555 = vmatpush1.bf16.msra.mxu0 %v1959
  %2556 = vmatprep.subr.bf16.mxu0 %v1964
  %2557 = vmatpush1.bf16.msra.mxu0 %v1963
  %2558 = vmatprep.subr.bf16.mxu0 %v1968
  %2559 = vmatpush1.bf16.msra.mxu0 %v1967
  %2560 = vmatprep.subr.bf16.mxu0 %v1972
  %2561 = vmatpush1.bf16.msra.mxu0 %v1971
  %2562 = vmatprep.subr.bf16.mxu0 %v1976
  %2563 = vmatpush1.bf16.msra.mxu0 %v1975
  %2564 = vmatprep.subr.bf16.mxu0 %v1980
  %2565 = vmatpush1.bf16.msra.mxu0 %v1979
  %2566 = vmatprep.subr.bf16.mxu0 %v1984
  %2567 = vmatpush1.bf16.msra.mxu0 %v1983
  %2568 = vmatprep.subr.bf16.mxu0 %v1988
  %2569 = vmatpush1.bf16.msra.mxu0 %v1987
  %2570 = vmatprep.subr.bf16.mxu0 %v1992
  %2571 = vmatpush1.bf16.msra.mxu0 %v1991
  %2572 = vmatprep.subr.bf16.mxu0 %v1996
  %2573 = vmatpush1.bf16.msra.mxu0 %v1995
  %2574 = vmatprep.subr.bf16.mxu0 %v2000
  %2575 = vmatpush1.bf16.msra.mxu0 %v1999
  %2576 = vmatprep.mubr.bf16.mxu0 %v698
  %2577 = vmatmul.mubr.bf16.gmra.mrb[0].mxu0 %v697
  %v2578 = vpop.f32.mrb[0].mxu0
  %v2579 = vadd.f32 %v2538, %v2578
  %v2580 = vpop.f32.mrb[0].mxu0
  %v2581 = vadd.f32 %v2540, %v2580
  %v2582 = vpop.f32.mrb[0].mxu0
  %v2583 = vpop.f32.mrb[0].mxu0
  %2584 = vdwg.mxu0
  %v2585 = vld [vmem:[%s2] sm:$0xff]
  %v2586 = vld [vmem:[%s2 + $0x8] sm:$0xff]
  %v2587 = vld [vmem:[%s2 + $0x10] sm:$0xff]
  %v2588 = vld [vmem:[%s2 + $0x18] sm:$0xff]
  %v2589 = vmul.f32 %v2415, 1.4285715
  %v2590 = vmul.f32 %v2417, 1.4285715
  %v2591 = vmul.f32 %v2579, 1.4285715
  %v2592 = vmul.f32 %v2581, 1.4285715
  %vm2593 = vcmp.gt.f32.partialorder %v2415, 0.0
  %vm2594 = vcmp.gt.f32.partialorder %v2417, 0.0
  %vm2595 = vcmp.gt.f32.partialorder %v2579, 0.0
  %vm2596 = vcmp.gt.f32.partialorder %v2581, 0.0
  %v2597 = vmul.f32 %v2589, 0.2
  %v2598 = vmul.f32 %v2590, 0.2
  %v2599 = vmul.f32 %v2591, 0.2
  %v2600 = vmul.f32 %v2592, 0.2
  %v2601 = vsel %vm2593, %v2589, %v2597
  %v2602 = vsel %vm2594, %v2590, %v2598
  %v2603 = vsel %vm2595, %v2591, %v2599
  %v2604 = vsel %vm2596, %v2592, %v2600
  %vm2605 = vcmp.ge.u32.totalorder %v2585, 1288490188
  %vm2606 = vcmp.ge.u32.totalorder %v2586, 1288490188
  %vm2607 = vcmp.ge.u32.totalorder %v2587, 1288490188
  %vm2608 = vcmp.ge.u32.totalorder %v2588, 1288490188
  %v2609 = vsel %vm2605, %v2601, 0.0
  %v2610 = vsel %vm2606, %v2602, 0.0
  %v2611 = vsel %vm2607, %v2603, 0.0
  %v2612 = vsel %vm2608, %v2604, 0.0
  %v2613 = vpack.c.bf16 %v2609, %v2609
  %v2614 = vpack.c.bf16 %v2610, %v2610
  %v2615 = vpack.c.bf16 %v2611, %v2611
  %v2616 = vpack.c.bf16 %v2612, %v2612
  %v2617 = vld [vmem:[%s8] sm:$0xff]
  %v2618 = vld [vmem:[%s8 + $0x8] sm:$0xff]
  %v2619 = vld [vmem:[%s8 + $0x10] sm:$0xff]
  %v2620 = vld [vmem:[%s8 + $0x18] sm:$0xff]
  %v2621 = vld [vmem:[%s8 + $0x20] sm:$0xff]
  %v2622 = vld [vmem:[%s8 + $0x28] sm:$0xff]
  %v2623 = vld [vmem:[%s8 + $0x30] sm:$0xff]
  %v2624 = vld [vmem:[%s8 + $0x38] sm:$0xff]
  %v2625 = vld [vmem:[%s8 + $0x40] sm:$0xff]
  %v2626 = vld [vmem:[%s8 + $0x48] sm:$0xff]
  %v2627 = vld [vmem:[%s8 + $0x50] sm:$0xff]
  %v2628 = vld [vmem:[%s8 + $0x58] sm:$0xff]
  %v2629 = vld [vmem:[%s8 + $0x60] sm:$0xff]
  %v2630 = vld [vmem:[%s8 + $0x68] sm:$0xff]
  %v2631 = vld [vmem:[%s8 + $0x70] sm:$0xff]
  %v2632 = vld [vmem:[%s8 + $0x78] sm:$0xff]
  %v2633 = vld [vmem:[%s8 + $0x80] sm:$0xff]
  %v2634 = vld [vmem:[%s8 + $0x88] sm:$0xff]
  %v2635 = vld [vmem:[%s8 + $0x90] sm:$0xff]
  %v2636 = vld [vmem:[%s8 + $0x98] sm:$0xff]
  %v2637 = vld [vmem:[%s8 + $0xa0] sm:$0xff]
  %v2638 = vld [vmem:[%s8 + $0xa8] sm:$0xff]
  %v2639 = vld [vmem:[%s8 + $0xb0] sm:$0xff]
  %v2640 = vld [vmem:[%s8 + $0xb8] sm:$0xff]
  %v2641 = vld [vmem:[%s8 + $0xc0] sm:$0xff]
  %v2642 = vld [vmem:[%s8 + $0xc8] sm:$0xff]
  %v2643 = vld [vmem:[%s8 + $0xd0] sm:$0xff]
  %v2644 = vld [vmem:[%s8 + $0xd8] sm:$0xff]
  %v2645 = vld [vmem:[%s8 + $0xe0] sm:$0xff]
  %v2646 = vld [vmem:[%s8 + $0xe8] sm:$0xff]
  %v2647 = vld [vmem:[%s8 + $0xf0] sm:$0xff]
  %v2648 = vld [vmem:[%s8 + $0xf8] sm:$0xff]
  %v2649 = vld [vmem:[%s8 + $0x100] sm:$0xff]
  %v2650 = vld [vmem:[%s8 + $0x108] sm:$0xff]
  %v2651 = vld [vmem:[%s8 + $0x110] sm:$0xff]
  %v2652 = vld [vmem:[%s8 + $0x118] sm:$0xff]
  %v2653 = vld [vmem:[%s8 + $0x120] sm:$0xff]
  %v2654 = vld [vmem:[%s8 + $0x128] sm:$0xff]
  %v2655 = vld [vmem:[%s8 + $0x130] sm:$0xff]
  %v2656 = vld [vmem:[%s8 + $0x138] sm:$0xff]
  %v2657 = vld [vmem:[%s8 + $0x140] sm:$0xff]
  %v2658 = vld [vmem:[%s8 + $0x148] sm:$0xff]
  %v2659 = vld [vmem:[%s8 + $0x150] sm:$0xff]
  %v2660 = vld [vmem:[%s8 + $0x158] sm:$0xff]
  %v2661 = vld [vmem:[%s8 + $0x160] sm:$0xff]
  %v2662 = vld [vmem:[%s8 + $0x168] sm:$0xff]
  %v2663 = vld [vmem:[%s8 + $0x170] sm:$0xff]
  %v2664 = vld [vmem:[%s8 + $0x178] sm:$0xff]
  %v2665 = vld [vmem:[%s8 + $0x180] sm:$0xff]
  %v2666 = vld [vmem:[%s8 + $0x188] sm:$0xff]
  %v2667 = vld [vmem:[%s8 + $0x190] sm:$0xff]
  %v2668 = vld [vmem:[%s8 + $0x198] sm:$0xff]
  %v2669 = vld [vmem:[%s8 + $0x1a0] sm:$0xff]
  %v2670 = vld [vmem:[%s8 + $0x1a8] sm:$0xff]
  %v2671 = vld [vmem:[%s8 + $0x1b0] sm:$0xff]
  %v2672 = vld [vmem:[%s8 + $0x1b8] sm:$0xff]
  %v2673 = vld [vmem:[%s8 + $0x1c0] sm:$0xff]
  %v2674 = vld [vmem:[%s8 + $0x1c8] sm:$0xff]
  %v2675 = vld [vmem:[%s8 + $0x1d0] sm:$0xff]
  %v2676 = vld [vmem:[%s8 + $0x1d8] sm:$0xff]
  %v2677 = vld [vmem:[%s8 + $0x1e0] sm:$0xff]
  %v2678 = vld [vmem:[%s8 + $0x1e8] sm:$0xff]
  %v2679 = vld [vmem:[%s8 + $0x1f0] sm:$0xff]
  %v2680 = vld [vmem:[%s8 + $0x1f8] sm:$0xff]
  %v2681 = vld [vmem:[%s9] sm:$0x3]
  %v2683 = vlaneseq
  %v2684 = vshrl.u32 %v2683, 7
  %v2685 = vsub.s32 0, %v2684
  %v2686 = vrot.slane %v2681, %v2685
  %v2687 = vlaneseq
  %v2688 = vshrl.u32 %v2687, 7
  %v2689 = vsub.s32 1, %v2688
  %v2690 = vrot.slane %v2681, %v2689
  %v2757 = vunpack.c.l.b16 %v2617
  %v2758 = vunpack.c.h.b16 %v2617
  %v2759 = vunpack.c.l.b16 %v2618
  %v2760 = vunpack.c.h.b16 %v2618
  %v2761 = vunpack.c.l.b16 %v2619
  %v2762 = vunpack.c.h.b16 %v2619
  %v2763 = vunpack.c.l.b16 %v2620
  %v2764 = vunpack.c.h.b16 %v2620
  %v2765 = vunpack.c.l.b16 %v2621
  %v2766 = vunpack.c.h.b16 %v2621
  %v2767 = vunpack.c.l.b16 %v2622
  %v2768 = vunpack.c.h.b16 %v2622
  %v2769 = vunpack.c.l.b16 %v2623
  %v2770 = vunpack.c.h.b16 %v2623
  %v2771 = vunpack.c.l.b16 %v2624
  %v2772 = vunpack.c.h.b16 %v2624
  %v2773 = vunpack.c.l.b16 %v2625
  %v2774 = vunpack.c.h.b16 %v2625
  %v2775 = vunpack.c.l.b16 %v2626
  %v2776 = vunpack.c.h.b16 %v2626
  %v2777 = vunpack.c.l.b16 %v2627
  %v2778 = vunpack.c.h.b16 %v2627
  %v2779 = vunpack.c.l.b16 %v2628
  %v2780 = vunpack.c.h.b16 %v2628
  %v2781 = vunpack.c.l.b16 %v2629
  %v2782 = vunpack.c.h.b16 %v2629
  %v2783 = vunpack.c.l.b16 %v2630
  %v2784 = vunpack.c.h.b16 %v2630
  %v2785 = vunpack.c.l.b16 %v2631
  %v2786 = vunpack.c.h.b16 %v2631
  %v2787 = vunpack.c.l.b16 %v2632
  %v2788 = vunpack.c.h.b16 %v2632
  %v2789 = vunpack.c.l.b16 %v2633
  %v2790 = vunpack.c.h.b16 %v2633
  %v2791 = vunpack.c.l.b16 %v2634
  %v2792 = vunpack.c.h.b16 %v2634
  %v2793 = vunpack.c.l.b16 %v2635
  %v2794 = vunpack.c.h.b16 %v2635
  %v2795 = vunpack.c.l.b16 %v2636
  %v2796 = vunpack.c.h.b16 %v2636
  %v2797 = vunpack.c.l.b16 %v2637
  %v2798 = vunpack.c.h.b16 %v2637
  %v2799 = vunpack.c.l.b16 %v2638
  %v2800 = vunpack.c.h.b16 %v2638
  %v2801 = vunpack.c.l.b16 %v2639
  %v2802 = vunpack.c.h.b16 %v2639
  %v2803 = vunpack.c.l.b16 %v2640
  %v2804 = vunpack.c.h.b16 %v2640
  %v2805 = vunpack.c.l.b16 %v2641
  %v2806 = vunpack.c.h.b16 %v2641
  %v2807 = vunpack.c.l.b16 %v2642
  %v2808 = vunpack.c.h.b16 %v2642
  %v2809 = vunpack.c.l.b16 %v2643
  %v2810 = vunpack.c.h.b16 %v2643
  %v2811 = vunpack.c.l.b16 %v2644
  %v2812 = vunpack.c.h.b16 %v2644
  %v2813 = vunpack.c.l.b16 %v2645
  %v2814 = vunpack.c.h.b16 %v2645
  %v2815 = vunpack.c.l.b16 %v2646
  %v2816 = vunpack.c.h.b16 %v2646
  %v2817 = vunpack.c.l.b16 %v2647
  %v2818 = vunpack.c.h.b16 %v2647
  %v2819 = vunpack.c.l.b16 %v2648
  %v2820 = vunpack.c.h.b16 %v2648
  %v2821 = vunpack.c.l.b16 %v2649
  %v2822 = vunpack.c.h.b16 %v2649
  %v2823 = vunpack.c.l.b16 %v2650
  %v2824 = vunpack.c.h.b16 %v2650
  %v2825 = vunpack.c.l.b16 %v2651
  %v2826 = vunpack.c.h.b16 %v2651
  %v2827 = vunpack.c.l.b16 %v2652
  %v2828 = vunpack.c.h.b16 %v2652
  %v2829 = vunpack.c.l.b16 %v2653
  %v2830 = vunpack.c.h.b16 %v2653
  %v2831 = vunpack.c.l.b16 %v2654
  %v2832 = vunpack.c.h.b16 %v2654
  %v2833 = vunpack.c.l.b16 %v2655
  %v2834 = vunpack.c.h.b16 %v2655
  %v2835 = vunpack.c.l.b16 %v2656
  %v2836 = vunpack.c.h.b16 %v2656
  %v2837 = vunpack.c.l.b16 %v2657
  %v2838 = vunpack.c.h.b16 %v2657
  %v2839 = vunpack.c.l.b16 %v2658
  %v2840 = vunpack.c.h.b16 %v2658
  %v2841 = vunpack.c.l.b16 %v2659
  %v2842 = vunpack.c.h.b16 %v2659
  %v2843 = vunpack.c.l.b16 %v2660
  %v2844 = vunpack.c.h.b16 %v2660
  %v2845 = vunpack.c.l.b16 %v2661
  %v2846 = vunpack.c.h.b16 %v2661
  %v2847 = vunpack.c.l.b16 %v2662
  %v2848 = vunpack.c.h.b16 %v2662
  %v2849 = vunpack.c.l.b16 %v2663
  %v2850 = vunpack.c.h.b16 %v2663
  %v2851 = vunpack.c.l.b16 %v2664
  %v2852 = vunpack.c.h.b16 %v2664
  %v2853 = vunpack.c.l.b16 %v2665
  %v2854 = vunpack.c.h.b16 %v2665
  %v2855 = vunpack.c.l.b16 %v2666
  %v2856 = vunpack.c.h.b16 %v2666
  %v2857 = vunpack.c.l.b16 %v2667
  %v2858 = vunpack.c.h.b16 %v2667
  %v2859 = vunpack.c.l.b16 %v2668
  %v2860 = vunpack.c.h.b16 %v2668
  %v2861 = vunpack.c.l.b16 %v2669
  %v2862 = vunpack.c.h.b16 %v2669
  %v2863 = vunpack.c.l.b16 %v2670
  %v2864 = vunpack.c.h.b16 %v2670
  %v2865 = vunpack.c.l.b16 %v2671
  %v2866 = vunpack.c.h.b16 %v2671
  %v2867 = vunpack.c.l.b16 %v2672
  %v2868 = vunpack.c.h.b16 %v2672
  %v2869 = vunpack.c.l.b16 %v2673
  %v2870 = vunpack.c.h.b16 %v2673
  %v2871 = vunpack.c.l.b16 %v2674
  %v2872 = vunpack.c.h.b16 %v2674
  %v2873 = vunpack.c.l.b16 %v2675
  %v2874 = vunpack.c.h.b16 %v2675
  %v2875 = vunpack.c.l.b16 %v2676
  %v2876 = vunpack.c.h.b16 %v2676
  %v2877 = vunpack.c.l.b16 %v2677
  %v2878 = vunpack.c.h.b16 %v2677
  %v2879 = vunpack.c.l.b16 %v2678
  %v2880 = vunpack.c.h.b16 %v2678
  %v2881 = vunpack.c.l.b16 %v2679
  %v2882 = vunpack.c.h.b16 %v2679
  %v2883 = vunpack.c.l.b16 %v2680
  %v2884 = vunpack.c.h.b16 %v2680
  %v2885 = vpack.c.b16 %v2759, %v2757
  %v2886 = vpack.c.b16 %v2760, %v2758
  %v2887 = vpack.c.b16 %v2763, %v2761
  %v2888 = vpack.c.b16 %v2764, %v2762
  %v2889 = vpack.c.b16 %v2767, %v2765
  %v2890 = vpack.c.b16 %v2768, %v2766
  %v2891 = vpack.c.b16 %v2771, %v2769
  %v2892 = vpack.c.b16 %v2772, %v2770
  %v2893 = vpack.c.b16 %v2775, %v2773
  %v2894 = vpack.c.b16 %v2776, %v2774
  %v2895 = vpack.c.b16 %v2779, %v2777
  %v2896 = vpack.c.b16 %v2780, %v2778
  %v2897 = vpack.c.b16 %v2783, %v2781
  %v2898 = vpack.c.b16 %v2784, %v2782
  %v2899 = vpack.c.b16 %v2787, %v2785
  %v2900 = vpack.c.b16 %v2788, %v2786
  %v2901 = vpack.c.b16 %v2791, %v2789
  %v2902 = vpack.c.b16 %v2792, %v2790
  %v2903 = vpack.c.b16 %v2795, %v2793
  %v2904 = vpack.c.b16 %v2796, %v2794
  %v2905 = vpack.c.b16 %v2799, %v2797
  %v2906 = vpack.c.b16 %v2800, %v2798
  %v2907 = vpack.c.b16 %v2803, %v2801
  %v2908 = vpack.c.b16 %v2804, %v2802
  %v2909 = vpack.c.b16 %v2807, %v2805
  %v2910 = vpack.c.b16 %v2808, %v2806
  %v2911 = vpack.c.b16 %v2811, %v2809
  %v2912 = vpack.c.b16 %v2812, %v2810
  %v2913 = vpack.c.b16 %v2815, %v2813
  %v2914 = vpack.c.b16 %v2816, %v2814
  %v2915 = vpack.c.b16 %v2819, %v2817
  %v2916 = vpack.c.b16 %v2820, %v2818
  %v2917 = vpack.c.b16 %v2823, %v2821
  %v2918 = vpack.c.b16 %v2824, %v2822
  %v2919 = vpack.c.b16 %v2827, %v2825
  %v2920 = vpack.c.b16 %v2828, %v2826
  %v2921 = vpack.c.b16 %v2831, %v2829
  %v2922 = vpack.c.b16 %v2832, %v2830
  %v2923 = vpack.c.b16 %v2835, %v2833
  %v2924 = vpack.c.b16 %v2836, %v2834
  %v2925 = vpack.c.b16 %v2839, %v2837
  %v2926 = vpack.c.b16 %v2840, %v2838
  %v2927 = vpack.c.b16 %v2843, %v2841
  %v2928 = vpack.c.b16 %v2844, %v2842
  %v2929 = vpack.c.b16 %v2847, %v2845
  %v2930 = vpack.c.b16 %v2848, %v2846
  %v2931 = vpack.c.b16 %v2851, %v2849
  %v2932 = vpack.c.b16 %v2852, %v2850
  %v2933 = vpack.c.b16 %v2855, %v2853
  %v2934 = vpack.c.b16 %v2856, %v2854
  %v2935 = vpack.c.b16 %v2859, %v2857
  %v2936 = vpack.c.b16 %v2860, %v2858
  %v2937 = vpack.c.b16 %v2863, %v2861
  %v2938 = vpack.c.b16 %v2864, %v2862
  %v2939 = vpack.c.b16 %v2867, %v2865
  %v2940 = vpack.c.b16 %v2868, %v2866
  %v2941 = vpack.c.b16 %v2871, %v2869
  %v2942 = vpack.c.b16 %v2872, %v2870
  %v2943 = vpack.c.b16 %v2875, %v2873
  %v2944 = vpack.c.b16 %v2876, %v2874
  %v2945 = vpack.c.b16 %v2879, %v2877
  %v2946 = vpack.c.b16 %v2880, %v2878
  %v2947 = vpack.c.b16 %v2883, %v2881
  %v2948 = vpack.c.b16 %v2884, %v2882
  %3013 = vmatprep.subr.bf16.mxu0 %v2886
  %3014 = vmatpush1.bf16.msra.mxu0 %v2885
  %3015 = vmatprep.subr.bf16.mxu0 %v2888
  %3016 = vmatpush1.bf16.msra.mxu0 %v2887
  %3017 = vmatprep.subr.bf16.mxu0 %v2890
  %3018 = vmatpush1.bf16.msra.mxu0 %v2889
  %3019 = vmatprep.subr.bf16.mxu0 %v2892
  %3020 = vmatpush1.bf16.msra.mxu0 %v2891
  %3021 = vmatprep.subr.bf16.mxu0 %v2894
  %3022 = vmatpush1.bf16.msra.mxu0 %v2893
  %3023 = vmatprep.subr.bf16.mxu0 %v2896
  %3024 = vmatpush1.bf16.msra.mxu0 %v2895
  %3025 = vmatprep.subr.bf16.mxu0 %v2898
  %3026 = vmatpush1.bf16.msra.mxu0 %v2897
  %3027 = vmatprep.subr.bf16.mxu0 %v2900
  %3028 = vmatpush1.bf16.msra.mxu0 %v2899
  %3029 = vmatprep.subr.bf16.mxu0 %v2902
  %3030 = vmatpush1.bf16.msra.mxu0 %v2901
  %3031 = vmatprep.subr.bf16.mxu0 %v2904
  %3032 = vmatpush1.bf16.msra.mxu0 %v2903
  %3033 = vmatprep.subr.bf16.mxu0 %v2906
  %3034 = vmatpush1.bf16.msra.mxu0 %v2905
  %3035 = vmatprep.subr.bf16.mxu0 %v2908
  %3036 = vmatpush1.bf16.msra.mxu0 %v2907
  %3037 = vmatprep.subr.bf16.mxu0 %v2910
  %3038 = vmatpush1.bf16.msra.mxu0 %v2909
  %3039 = vmatprep.subr.bf16.mxu0 %v2912
  %3040 = vmatpush1.bf16.msra.mxu0 %v2911
  %3041 = vmatprep.subr.bf16.mxu0 %v2914
  %3042 = vmatpush1.bf16.msra.mxu0 %v2913
  %3043 = vmatprep.subr.bf16.mxu0 %v2916
  %3044 = vmatpush1.bf16.msra.mxu0 %v2915
  %3045 = vmatprep.mubr.bf16.mxu0 %v2614
  %3046 = vmatmul.mubr.bf16.gmra.mrb[0].mxu0 %v2613
  %v3047 = vpop.f32.mrb[0].mxu0
  %v3048 = vadd.f32 %v2686, %v3047
  %v3049 = vpop.f32.mrb[0].mxu0
  %v3050 = vadd.f32 %v2690, %v3049
  %v3051 = vpop.f32.mrb[0].mxu0
  %v3052 = vpop.f32.mrb[0].mxu0
  %3053 = vdwg.mxu0
  %3054 = vmatprep.subr.bf16.mxu0 %v2918
  %3055 = vmatpush1.bf16.msra.mxu0 %v2917
  %3056 = vmatprep.subr.bf16.mxu0 %v2920
  %3057 = vmatpush1.bf16.msra.mxu0 %v2919
  %3058 = vmatprep.subr.bf16.mxu0 %v2922
  %3059 = vmatpush1.bf16.msra.mxu0 %v2921
  %3060 = vmatprep.subr.bf16.mxu0 %v2924
  %3061 = vmatpush1.bf16.msra.mxu0 %v2923
  %3062 = vmatprep.subr.bf16.mxu0 %v2926
  %3063 = vmatpush1.bf16.msra.mxu0 %v2925
  %3064 = vmatprep.subr.bf16.mxu0 %v2928
  %3065 = vmatpush1.bf16.msra.mxu0 %v2927
  %3066 = vmatprep.subr.bf16.mxu0 %v2930
  %3067 = vmatpush1.bf16.msra.mxu0 %v2929
  %3068 = vmatprep.subr.bf16.mxu0 %v2932
  %3069 = vmatpush1.bf16.msra.mxu0 %v2931
  %3070 = vmatprep.subr.bf16.mxu0 %v2934
  %3071 = vmatpush1.bf16.msra.mxu0 %v2933
  %3072 = vmatprep.subr.bf16.mxu0 %v2936
  %3073 = vmatpush1.bf16.msra.mxu0 %v2935
  %3074 = vmatprep.subr.bf16.mxu0 %v2938
  %3075 = vmatpush1.bf16.msra.mxu0 %v2937
  %3076 = vmatprep.subr.bf16.mxu0 %v2940
  %3077 = vmatpush1.bf16.msra.mxu0 %v2939
  %3078 = vmatprep.subr.bf16.mxu0 %v2942
  %3079 = vmatpush1.bf16.msra.mxu0 %v2941
  %3080 = vmatprep.subr.bf16.mxu0 %v2944
  %3081 = vmatpush1.bf16.msra.mxu0 %v2943
  %3082 = vmatprep.subr.bf16.mxu0 %v2946
  %3083 = vmatpush1.bf16.msra.mxu0 %v2945
  %3084 = vmatprep.subr.bf16.mxu0 %v2948
  %3085 = vmatpush1.bf16.msra.mxu0 %v2947
  %3086 = vmatprep.mubr.bf16.mxu0 %v2616
  %3087 = vmatmul.mubr.bf16.gmra.mrb[0].mxu0 %v2615
  %v3088 = vpop.f32.mrb[0].mxu0
  %v3089 = vadd.f32 %v3048, %v3088
  %v3090 = vpop.f32.mrb[0].mxu0
  %v3091 = vadd.f32 %v3050, %v3090
  %v3092 = vpop.f32.mrb[0].mxu0
  %v3093 = vpop.f32.mrb[0].mxu0
  %3094 = vdwg.mxu0
  %v3095 = vld [vmem:[%s3] sm:$0xff]
  %v3096 = vld [vmem:[%s3 + $0x8] sm:$0xff]
  %v3097 = vmul.f32 %v3089, 1.4285715
  %v3098 = vmul.f32 %v3091, 1.4285715
  %vm3099 = vcmp.gt.f32.partialorder %v3089, 0.0
  %vm3100 = vcmp.gt.f32.partialorder %v3091, 0.0
  %v3101 = vmul.f32 %v3097, 0.2
  %v3102 = vmul.f32 %v3098, 0.2
  %v3103 = vsel %vm3099, %v3097, %v3101
  %v3104 = vsel %vm3100, %v3098, %v3102
  %vm3105 = vcmp.ge.u32.totalorder %v3095, 1288490188
  %vm3106 = vcmp.ge.u32.totalorder %v3096, 1288490188
  %v3107 = vsel %vm3105, %v3103, 0.0
  %v3108 = vsel %vm3106, %v3104, 0.0
  %v3109 = vld [vmem:[%s10] sm:$0x3]
  %v3111 = vlaneseq
  %v3112 = vshrl.u32 %v3111, 7
  %v3113 = vsub.s32 0, %v3112
  %v3114 = vrot.slane %v3109, %v3113
  %v3115 = vlaneseq
  %v3116 = vshrl.u32 %v3115, 7
  %v3117 = vsub.s32 1, %v3116
  %v3118 = vrot.slane %v3109, %v3117
  %v3121 = vmul.f32 %v3107, %v3114
  %v3122 = vmul.f32 %v3108, %v3118
  %v3123 = vadd.f32 %v3121, %v3122
  %3124 = vadd.xlane.f32.xlu0 %v3123
  %v3125 = vpop.xlane.xlu0 %3124
  %v3126 = vld [vmem:[#allocation2] sm:$0x1]
  %v3128 = vlaneseq
  %v3129 = vshrl.u32 %v3128, 7
  %v3130 = vsub.s32 0, %v3129
  %v3131 = vrot.slane %v3126, %v3130
  %v3133 = vadd.f32 %v3125, %v3131
  %v3134 = vxor.u32 %v3133, 2147483648
  %v3135 = vmul.f32 %v3134, 1.442695
  %v3136 = vpow.pop %v3135
  %v3137 = vadd.f32 %v3136, 1.0
  %v3138 = vrcp.pop %v3137
  %v3139 = vmul.f32 1.0, %v3138
  %vm3140 = vcmask 7168
  %3141 = vst.msk [vmem:[%s12] sm:$0xff] %vm3140, %v3139
  // Predicated region
  $region50: #{discriminator_forward.3} parent=0 // pred_check
    _
  $region51: #{discriminator_forward.3} parent=0 // pred_check_branch
    %3143 = sbr.rel (0) target = $region53
  $region52: #{discriminator_forward.3} parent=0 // pred_region
    _
  $region53: #{discriminator_forward.3} parent=0 // pred_fallthru
    _
  // Predicated region
  $region54: #{discriminator_forward.3} parent=0 // pred_check
    _
  $region55: #{discriminator_forward.3} parent=0 // pred_check_branch
    %3145 = sbr.rel (0) target = $region57
  $region56: #{discriminator_forward.3} parent=0 // pred_region
    _
  $region57: #{discriminator_forward.3} parent=0 // pred_fallthru
    _

</llo_original>
